<compile_context>
chip_gen: v7x
topology: tpu7x:2x2x1
jax: 0.10.0
libtpu: 0.0.40
codegen_flags: <defaults>
</compile_context>

<pallas_src>
import jax
import jax.numpy as jnp
from jax import lax
from jax.experimental import pallas as pl
from jax.experimental.pallas import tpu as pltpu


def _make_kernel(N, TQ):
    num_q = N // TQ

    def kernel(x_ref, wf_ref, bf_ref, wg_ref, bg_ref, wh_ref, bh_ref,
               o_ref, f_scr, g_scr, h_scr, acc_scr):
        # x block: (1, C, N) f32.  Weights are pre-cast to bf16 in the wrapper.
        xb = x_ref[0].astype(jnp.bfloat16)                         # (C, N)

        # 1x1 convolutions == channel matmuls (bf16 operands, f32 accumulate).
        f_scr[...] = (jnp.dot(wf_ref[...], xb,
                              preferred_element_type=jnp.float32)
                      + bf_ref[...]).astype(jnp.bfloat16)          # (C8, N)
        g_scr[...] = (jnp.dot(wg_ref[...], xb,
                              preferred_element_type=jnp.float32)
                      + bg_ref[...]).astype(jnp.bfloat16)          # (C8, N)
        h_scr[...] = (jnp.dot(wh_ref[...], xb,
                              preferred_element_type=jnp.float32)
                      + bh_ref[...]).astype(jnp.bfloat16)          # (C, N); gamma folded

        acc_scr[...] = jnp.zeros_like(acc_scr)                     # (C, N) f32

        # Row-tiled attention: never materialize the (N, N) matrix.
        @pl.loop(0, num_q, unroll=num_q <= 8)
        def _(q):
            q0 = pl.multiple_of(q * TQ, TQ)
            f_q = f_scr[:, pl.ds(q0, TQ)]                          # (C8, TQ) bf16
            # logits[i, j] = sum_k f_q[k, i] * g[k, j]   -> (TQ, N) f32
            s = lax.dot_general(f_q, g_scr[...],
                                (((0,), (0,)), ((), ())),
                                preferred_element_type=jnp.float32)
            # Row softmax in f32 (Softmax(dim=2) in the reference module).
            s = s - jnp.max(s, axis=-1, keepdims=True)
            p = jnp.exp(s)
            p = p * pl.reciprocal(jnp.sum(p, axis=-1, keepdims=True),
                                  approx=True)
            h_q = h_scr[:, pl.ds(q0, TQ)]                          # (C, TQ) bf16
            acc_scr[...] += jnp.dot(h_q, p.astype(jnp.bfloat16),
                                    preferred_element_type=jnp.float32)

        # gamma already folded into the h projection; just add the residual.
        o_ref[0] = (acc_scr[...] + x_ref[0]).astype(o_ref.dtype)

    return kernel


def _pick_tq(N, max_tq=512):
    """Largest query-row tile <= max_tq dividing N (prefer multiples of 128)."""
    if N <= max_tq:
        return N
    best = None
    for tq in range(max_tq, 0, -1):
        if N % tq == 0:
            if tq % 128 == 0:
                return tq
            if best is None:
                best = tq
    return best if best is not None else N


def _vmem_limit_bytes(C, C8, N, TQ):
    f32, bf16 = 4, 2
    io = 2 * (C * N * f32) * 2                      # x + out blocks, double-buffered
    wts = 2 * ((2 * C8 * C + C * C) * bf16 + (2 * C8 + C) * f32)
    scratch = (2 * C8 * N + C * N) * bf16 + C * N * f32
    work = 4 * TQ * N * f32                         # logits/exp tile temporaries
    est = io + wts + scratch + work
    return int(min(max(2 * est, 32 * 1024 * 1024), 100 * 1024 * 1024))


def self_attention_forward(x, params, *, tq=None):
    """x: (B, C, H, W) float32 (NCHW, same as the PyTorch module)."""
    B, C, H, W = x.shape
    assert C % 8 == 0, "in_channels must be a multiple of 8 (C // 8 projection)"
    N = H * W
    C8 = C // 8
    xr = x.reshape(B, C, N)

    if tq is None:
        tq = _pick_tq(N)
    assert N % tq == 0

    gamma = params["gamma"].astype(jnp.float32)[0]
    # Fold gamma into the h projection: y = (gamma*Wh x + gamma*bh) @ attn + x.
    wf = params["wf"].astype(jnp.bfloat16)
    wg = params["wg"].astype(jnp.bfloat16)
    wh = (gamma * params["wh"]).astype(jnp.bfloat16)
    bf = params["bf"].astype(jnp.float32).reshape(C8, 1)
    bg = params["bg"].astype(jnp.float32).reshape(C8, 1)
    bh = (gamma * params["bh"]).astype(jnp.float32).reshape(C, 1)

    def full_spec(shape):
        return pl.BlockSpec(shape, lambda b: (0,) * len(shape))

    out = pl.pallas_call(
        _make_kernel(N, tq),
        out_shape=jax.ShapeDtypeStruct((B, C, N), x.dtype),
        grid=(B,),
        in_specs=[
            pl.BlockSpec((1, C, N), lambda b: (b, 0, 0)),   # x
            full_spec((C8, C)), full_spec((C8, 1)),         # f: weight, bias
            full_spec((C8, C)), full_spec((C8, 1)),         # g: weight, bias
            full_spec((C, C)), full_spec((C, 1)),           # h (gamma folded)
        ],
        out_specs=pl.BlockSpec((1, C, N), lambda b: (b, 0, 0)),
        scratch_shapes=[
            pltpu.VMEM((C8, N), jnp.bfloat16),   # f projection
            pltpu.VMEM((C8, N), jnp.bfloat16),   # g projection
            pltpu.VMEM((C, N), jnp.bfloat16),    # h projection (gamma folded)
            pltpu.VMEM((C, N), jnp.float32),     # output accumulator
        ],
        compiler_params=pltpu.CompilerParams(
            dimension_semantics=("parallel",),
            vmem_limit_bytes=_vmem_limit_bytes(C, C8, N, tq),
        ),
    )(xr, wf, bf, wg, bg, wh, bh)

    return out.reshape(B, C, H, W)


def reference_forward(x, params):
    """Pure-JAX f32 reference mirroring the PyTorch forward exactly."""
    B, C, H, W = x.shape
    N = H * W
    xr = x.reshape(B, C, N)
    f = jnp.einsum('oc,bcn->bon', params["wf"], xr) + params["bf"][None, :, None]
    g = jnp.einsum('oc,bcn->bon', params["wg"], xr) + params["bg"][None, :, None]
    h = jnp.einsum('oc,bcn->bon', params["wh"], xr) + params["bh"][None, :, None]
    attn = jnp.einsum('bki,bkj->bij', f, g)                 # bmm(f^T, g)
    attn = jax.nn.softmax(attn, axis=2)
    out = jnp.einsum('bck,bkm->bcm', h, attn)               # bmm(h, attn)
    return (params["gamma"][0] * out + xr).reshape(B, C, H, W)


def init_params(key, in_channels):
    """Shapes/init matching the module: kaiming_uniform_ conv weights
    (fan_in = in_channels for 1x1 conv, bound = sqrt(6/fan_in)), zero biases,
    gamma = zeros(1)."""
    c8 = in_channels // 8
    kf, kg, kh = jax.random.split(key, 3)
    bound = (6.0 / in_channels) ** 0.5
    uni = lambda k, shape: jax.random.uniform(
        k, shape, dtype=jnp.float32, minval=-bound, maxval=bound)
    return {
        "wf": uni(kf, (c8, in_channels)),
        "bf": jnp.zeros((c8,), jnp.float32),
        "wg": uni(kg, (c8, in_channels)),
        "bg": jnp.zeros((c8,), jnp.float32),
        "wh": uni(kh, (in_channels, in_channels)),
        "bh": jnp.zeros((in_channels,), jnp.float32),
        "gamma": jnp.zeros((1,), jnp.float32),   # module init: torch.zeros(1)
    }


if __name__ == "__main__":
    B, C, H, W = 2, 128, 16, 16      # N = 256 (lane-dense), C // 8 = 16
    key = jax.random.PRNGKey(0)
    kx, kp = jax.random.split(key)
    x = 0.5 * jax.random.normal(kx, (B, C, H, W), dtype=jnp.float32)
    params = init_params(kp, C)

    fwd = jax.jit(lambda xx, pp: self_attention_forward(xx, pp, tq=128))

    # Module-faithful init (gamma == 0): output equals the input exactly.
    y0 = jax.block_until_ready(fwd(x, params))
    r0 = reference_forward(x, params)
    assert jnp.allclose(y0, r0, atol=1e-5, rtol=1e-5)

    # Non-trivial (learned) gamma exercises the full attention path; bf16 MXU
    # operands + approx reciprocal => loosened tolerance vs the f32 reference.
    params_nz = dict(params, gamma=jnp.full((1,), 0.5, jnp.float32))
    y1 = jax.block_until_ready(fwd(x, params_nz))
    r1 = reference_forward(x, params_nz)
    assert jnp.allclose(y1, r1, atol=5e-2, rtol=5e-2), float(
        jnp.max(jnp.abs(y1 - r1)))

    print("KERNEL_OK")
</pallas_src>

<mosaic_0001>
module attributes {stable_mosaic.version = 11 : i64} {
  func.func @kernel(%arg0: i32, %arg1: memref<1x128x256xf32, #tpu.memory_space<vmem>>, %arg2: memref<16x128xbf16, #tpu.memory_space<vmem>>, %arg3: memref<16x1xf32, #tpu.memory_space<vmem>>, %arg4: memref<16x128xbf16, #tpu.memory_space<vmem>>, %arg5: memref<16x1xf32, #tpu.memory_space<vmem>>, %arg6: memref<128x128xbf16, #tpu.memory_space<vmem>>, %arg7: memref<128x1xf32, #tpu.memory_space<vmem>>, %arg8: memref<1x128x256xf32, #tpu.memory_space<vmem>>, %arg9: memref<16x256xbf16, #tpu.memory_space<vmem>>, %arg10: memref<16x256xbf16, #tpu.memory_space<vmem>>, %arg11: memref<128x256xbf16, #tpu.memory_space<vmem>>, %arg12: memref<128x256xf32, #tpu.memory_space<vmem>>) attributes {dimension_semantics = [#tpu.dimension_semantics<parallel>], iteration_bounds = array<i64: 2>, scalar_prefetch = 0 : i64, scratch_operands = 4 : i64, tpu.core_type = #tpu.core_type<tc>, window_params = [{transform_indices = @transform_0, window_bounds = array<i64: 1, 128, 256>}, {pipeline_mode = #tpu.pipeline_mode<synchronous>, transform_indices = @transform_1, window_bounds = array<i64: 16, 128>}, {pipeline_mode = #tpu.pipeline_mode<synchronous>, transform_indices = @transform_2, window_bounds = array<i64: 16, 1>}, {pipeline_mode = #tpu.pipeline_mode<synchronous>, transform_indices = @transform_3, window_bounds = array<i64: 16, 128>}, {pipeline_mode = #tpu.pipeline_mode<synchronous>, transform_indices = @transform_4, window_bounds = array<i64: 16, 1>}, {pipeline_mode = #tpu.pipeline_mode<synchronous>, transform_indices = @transform_5, window_bounds = array<i64: 128, 128>}, {pipeline_mode = #tpu.pipeline_mode<synchronous>, transform_indices = @transform_6, window_bounds = array<i64: 128, 1>}, {transform_indices = @transform_7, window_bounds = array<i64: 1, 128, 256>}]} {
    %c0 = arith.constant 0 : index
    %c0_0 = arith.constant 0 : index
    %c0_1 = arith.constant 0 : index
    %0 = vector.load %arg1[%c0, %c0_0, %c0_1] : memref<1x128x256xf32, #tpu.memory_space<vmem>>, vector<1x128x256xf32>
    %1 = vector.shape_cast %0 : vector<1x128x256xf32> to vector<128x256xf32>
    %2 = arith.truncf %1 : vector<128x256xf32> to vector<128x256xbf16>
    %c0_2 = arith.constant 0 : index
    %c0_3 = arith.constant 0 : index
    %3 = vector.load %arg2[%c0_2, %c0_3] : memref<16x128xbf16, #tpu.memory_space<vmem>>, vector<16x128xbf16>
    %cst = arith.constant dense<0.000000e+00> : vector<16x256xf32>
    %4 = tpu.matmul %3, %2, %cst {dimension_numbers = #tpu.dot_dimension_numbers<[1], [0], [0], [1], [0, 0, 1, 1], [], []>} : vector<16x128xbf16>, vector<128x256xbf16>, vector<16x256xf32> -> vector<16x256xf32>
    %c0_4 = arith.constant 0 : index
    %c0_5 = arith.constant 0 : index
    %5 = vector.load %arg3[%c0_4, %c0_5] : memref<16x1xf32, #tpu.memory_space<vmem>>, vector<16x1xf32>
    %6 = vector.broadcast %5 : vector<16x1xf32> to vector<16x256xf32>
    %7 = arith.addf %4, %6 : vector<16x256xf32>
    %8 = arith.truncf %7 : vector<16x256xf32> to vector<16x256xbf16>
    %c0_6 = arith.constant 0 : index
    %c0_7 = arith.constant 0 : index
    %9 = vector.load %arg9[%c0_6, %c0_7] : memref<16x256xbf16, #tpu.memory_space<vmem>>, vector<16x256xbf16>
    tpu.vector_store %arg9[%c0_6, %c0_7], %8 {strides = array<i32>} : memref<16x256xbf16, #tpu.memory_space<vmem>>, vector<16x256xbf16>,
    %c0_8 = arith.constant 0 : index
    %c0_9 = arith.constant 0 : index
    %10 = vector.load %arg4[%c0_8, %c0_9] : memref<16x128xbf16, #tpu.memory_space<vmem>>, vector<16x128xbf16>
    %cst_10 = arith.constant dense<0.000000e+00> : vector<16x256xf32>
    %11 = tpu.matmul %10, %2, %cst_10 {dimension_numbers = #tpu.dot_dimension_numbers<[1], [0], [0], [1], [0, 0, 1, 1], [], []>} : vector<16x128xbf16>, vector<128x256xbf16>, vector<16x256xf32> -> vector<16x256xf32>
    %c0_11 = arith.constant 0 : index
    %c0_12 = arith.constant 0 : index
    %12 = vector.load %arg5[%c0_11, %c0_12] : memref<16x1xf32, #tpu.memory_space<vmem>>, vector<16x1xf32>
    %13 = vector.broadcast %12 : vector<16x1xf32> to vector<16x256xf32>
    %14 = arith.addf %11, %13 : vector<16x256xf32>
    %15 = arith.truncf %14 : vector<16x256xf32> to vector<16x256xbf16>
    %c0_13 = arith.constant 0 : index
    %c0_14 = arith.constant 0 : index
    %16 = vector.load %arg10[%c0_13, %c0_14] : memref<16x256xbf16, #tpu.memory_space<vmem>>, vector<16x256xbf16>
    tpu.vector_store %arg10[%c0_13, %c0_14], %15 {strides = array<i32>} : memref<16x256xbf16, #tpu.memory_space<vmem>>, vector<16x256xbf16>,
    %c0_15 = arith.constant 0 : index
    %c0_16 = arith.constant 0 : index
    %17 = vector.load %arg6[%c0_15, %c0_16] : memref<128x128xbf16, #tpu.memory_space<vmem>>, vector<128x128xbf16>
    %cst_17 = arith.constant dense<0.000000e+00> : vector<128x256xf32>
    %18 = tpu.matmul %17, %2, %cst_17 {dimension_numbers = #tpu.dot_dimension_numbers<[1], [0], [0], [1], [0, 0, 1, 1], [], []>} : vector<128x128xbf16>, vector<128x256xbf16>, vector<128x256xf32> -> vector<128x256xf32>
    %c0_18 = arith.constant 0 : index
    %c0_19 = arith.constant 0 : index
    %19 = vector.load %arg7[%c0_18, %c0_19] : memref<128x1xf32, #tpu.memory_space<vmem>>, vector<128x1xf32>
    %20 = vector.broadcast %19 : vector<128x1xf32> to vector<128x256xf32>
    %21 = arith.addf %18, %20 : vector<128x256xf32>
    %22 = arith.truncf %21 : vector<128x256xf32> to vector<128x256xbf16>
    %c0_20 = arith.constant 0 : index
    %c0_21 = arith.constant 0 : index
    %23 = vector.load %arg11[%c0_20, %c0_21] : memref<128x256xbf16, #tpu.memory_space<vmem>>, vector<128x256xbf16>
    tpu.vector_store %arg11[%c0_20, %c0_21], %22 {strides = array<i32>} : memref<128x256xbf16, #tpu.memory_space<vmem>>, vector<128x256xbf16>,
    %cst_22 = arith.constant 0.000000e+00 : f32
    %24 = vector.broadcast %cst_22 : f32 to vector<128x256xf32>
    %c0_23 = arith.constant 0 : index
    %c0_24 = arith.constant 0 : index
    %25 = vector.load %arg12[%c0_23, %c0_24] : memref<128x256xf32, #tpu.memory_space<vmem>>, vector<128x256xf32>
    tpu.vector_store %arg12[%c0_23, %c0_24], %24 {strides = array<i32>} : memref<128x256xf32, #tpu.memory_space<vmem>>, vector<128x256xf32>,
    %c0_i32 = arith.constant 0 : i32
    %c1_i32 = arith.constant 1 : i32
    %26 = arith.muli %c0_i32, %c1_i32 : i32
    %c0_i32_25 = arith.constant 0 : i32
    %27 = arith.addi %c0_i32_25, %26 : i32
    %c128_i32 = arith.constant 128 : i32
    %28 = arith.muli %27, %c128_i32 : i32
    %29 = tpu.assume_multiple %28, 128 : i32
    %c0_26 = arith.constant 0 : index
    %30 = arith.index_cast %29 : i32 to index
    %31 = vector.load %arg9[%c0_26, %30] : memref<16x256xbf16, #tpu.memory_space<vmem>>, vector<16x128xbf16>
    %c0_27 = arith.constant 0 : index
    %c0_28 = arith.constant 0 : index
    %32 = vector.load %arg10[%c0_27, %c0_28] : memref<16x256xbf16, #tpu.memory_space<vmem>>, vector<16x256xbf16>
    %cst_29 = arith.constant dense<0.000000e+00> : vector<128x256xf32>
    %33 = tpu.matmul %31, %32, %cst_29 {dimension_numbers = #tpu.dot_dimension_numbers<[0], [0], [1], [1], [0, 1, 1, 1], [], []>} : vector<16x128xbf16>, vector<16x256xbf16>, vector<128x256xf32> -> vector<128x256xf32>
    %cst_30 = arith.constant dense<0xFF800000> : vector<128xf32>
    %34 = vector.multi_reduction <maximumf>, %33, %cst_30 [1] : vector<128x256xf32> to vector<128xf32>
    %35 = vector.shape_cast %34 : vector<128xf32> to vector<128x1xf32>
    %36 = vector.broadcast %35 : vector<128x1xf32> to vector<128x256xf32>
    %37 = arith.subf %33, %36 : vector<128x256xf32>
    %38 = math.exp %37 : vector<128x256xf32>
    %cst_31 = arith.constant dense<0.000000e+00> : vector<128xf32>
    %39 = vector.multi_reduction <add>, %38, %cst_31 [1] : vector<128x256xf32> to vector<128xf32>
    %40 = vector.shape_cast %39 : vector<128xf32> to vector<128x1xf32>
    %41 = tpu.reciprocal %40 {approx = true} : vector<128x1xf32> -> vector<128x1xf32>
    %42 = vector.broadcast %41 : vector<128x1xf32> to vector<128x256xf32>
    %43 = arith.mulf %38, %42 : vector<128x256xf32>
    %c0_32 = arith.constant 0 : index
    %44 = arith.index_cast %29 : i32 to index
    %45 = vector.load %arg11[%c0_32, %44] : memref<128x256xbf16, #tpu.memory_space<vmem>>, vector<128x128xbf16>
    %c0_33 = arith.constant 0 : index
    %c0_34 = arith.constant 0 : index
    %46 = vector.load %arg12[%c0_33, %c0_34] : memref<128x256xf32, #tpu.memory_space<vmem>>, vector<128x256xf32>
    %47 = arith.truncf %43 : vector<128x256xf32> to vector<128x256xbf16>
    %cst_35 = arith.constant dense<0.000000e+00> : vector<128x256xf32>
    %48 = tpu.matmul %45, %47, %cst_35 {dimension_numbers = #tpu.dot_dimension_numbers<[1], [0], [0], [1], [0, 0, 1, 1], [], []>} : vector<128x128xbf16>, vector<128x256xbf16>, vector<128x256xf32> -> vector<128x256xf32>
    %49 = arith.addf %46, %48 : vector<128x256xf32>
    %c0_36 = arith.constant 0 : index
    %c0_37 = arith.constant 0 : index
    %50 = vector.load %arg12[%c0_36, %c0_37] : memref<128x256xf32, #tpu.memory_space<vmem>>, vector<128x256xf32>
    tpu.vector_store %arg12[%c0_36, %c0_37], %49 {strides = array<i32>} : memref<128x256xf32, #tpu.memory_space<vmem>>, vector<128x256xf32>,
    %c1_i32_38 = arith.constant 1 : i32
    %c1_i32_39 = arith.constant 1 : i32
    %51 = arith.muli %c1_i32_38, %c1_i32_39 : i32
    %c0_i32_40 = arith.constant 0 : i32
    %52 = arith.addi %c0_i32_40, %51 : i32
    %c128_i32_41 = arith.constant 128 : i32
    %53 = arith.muli %52, %c128_i32_41 : i32
    %54 = tpu.assume_multiple %53, 128 : i32
    %c0_42 = arith.constant 0 : index
    %55 = arith.index_cast %54 : i32 to index
    %56 = vector.load %arg9[%c0_42, %55] : memref<16x256xbf16, #tpu.memory_space<vmem>>, vector<16x128xbf16>
    %c0_43 = arith.constant 0 : index
    %c0_44 = arith.constant 0 : index
    %57 = vector.load %arg10[%c0_43, %c0_44] : memref<16x256xbf16, #tpu.memory_space<vmem>>, vector<16x256xbf16>
    %cst_45 = arith.constant dense<0.000000e+00> : vector<128x256xf32>
    %58 = tpu.matmul %56, %57, %cst_45 {dimension_numbers = #tpu.dot_dimension_numbers<[0], [0], [1], [1], [0, 1, 1, 1], [], []>} : vector<16x128xbf16>, vector<16x256xbf16>, vector<128x256xf32> -> vector<128x256xf32>
    %cst_46 = arith.constant dense<0xFF800000> : vector<128xf32>
    %59 = vector.multi_reduction <maximumf>, %58, %cst_46 [1] : vector<128x256xf32> to vector<128xf32>
    %60 = vector.shape_cast %59 : vector<128xf32> to vector<128x1xf32>
    %61 = vector.broadcast %60 : vector<128x1xf32> to vector<128x256xf32>
    %62 = arith.subf %58, %61 : vector<128x256xf32>
    %63 = math.exp %62 : vector<128x256xf32>
    %cst_47 = arith.constant dense<0.000000e+00> : vector<128xf32>
    %64 = vector.multi_reduction <add>, %63, %cst_47 [1] : vector<128x256xf32> to vector<128xf32>
    %65 = vector.shape_cast %64 : vector<128xf32> to vector<128x1xf32>
    %66 = tpu.reciprocal %65 {approx = true} : vector<128x1xf32> -> vector<128x1xf32>
    %67 = vector.broadcast %66 : vector<128x1xf32> to vector<128x256xf32>
    %68 = arith.mulf %63, %67 : vector<128x256xf32>
    %c0_48 = arith.constant 0 : index
    %69 = arith.index_cast %54 : i32 to index
    %70 = vector.load %arg11[%c0_48, %69] : memref<128x256xbf16, #tpu.memory_space<vmem>>, vector<128x128xbf16>
    %c0_49 = arith.constant 0 : index
    %c0_50 = arith.constant 0 : index
    %71 = vector.load %arg12[%c0_49, %c0_50] : memref<128x256xf32, #tpu.memory_space<vmem>>, vector<128x256xf32>
    %72 = arith.truncf %68 : vector<128x256xf32> to vector<128x256xbf16>
    %cst_51 = arith.constant dense<0.000000e+00> : vector<128x256xf32>
    %73 = tpu.matmul %70, %72, %cst_51 {dimension_numbers = #tpu.dot_dimension_numbers<[1], [0], [0], [1], [0, 0, 1, 1], [], []>} : vector<128x128xbf16>, vector<128x256xbf16>, vector<128x256xf32> -> vector<128x256xf32>
    %74 = arith.addf %71, %73 : vector<128x256xf32>
    %c0_52 = arith.constant 0 : index
    %c0_53 = arith.constant 0 : index
    %75 = vector.load %arg12[%c0_52, %c0_53] : memref<128x256xf32, #tpu.memory_space<vmem>>, vector<128x256xf32>
    tpu.vector_store %arg12[%c0_52, %c0_53], %74 {strides = array<i32>} : memref<128x256xf32, #tpu.memory_space<vmem>>, vector<128x256xf32>,
    %c2_i32 = arith.constant 2 : i32
    %c0_54 = arith.constant 0 : index
    %c0_55 = arith.constant 0 : index
    %76 = vector.load %arg12[%c0_54, %c0_55] : memref<128x256xf32, #tpu.memory_space<vmem>>, vector<128x256xf32>
    %c0_56 = arith.constant 0 : index
    %c0_57 = arith.constant 0 : index
    %c0_58 = arith.constant 0 : index
    %77 = vector.load %arg1[%c0_56, %c0_57, %c0_58] : memref<1x128x256xf32, #tpu.memory_space<vmem>>, vector<1x128x256xf32>
    %78 = vector.shape_cast %77 : vector<1x128x256xf32> to vector<128x256xf32>
    %79 = arith.addf %76, %78 : vector<128x256xf32>
    %c0_59 = arith.constant 0 : index
    %c0_60 = arith.constant 0 : index
    %c0_61 = arith.constant 0 : index
    %80 = vector.load %arg8[%c0_59, %c0_60, %c0_61] : memref<1x128x256xf32, #tpu.memory_space<vmem>>, vector<1x128x256xf32>
    %81 = vector.shape_cast %80 : vector<1x128x256xf32> to vector<128x256xf32>
    %82 = vector.shape_cast %79 : vector<128x256xf32> to vector<1x128x256xf32>
    tpu.vector_store %arg8[%c0_59, %c0_60, %c0_61], %82 {strides = array<i32>} : memref<1x128x256xf32, #tpu.memory_space<vmem>>, vector<1x128x256xf32>,
    return
  }
  func.func @transform_0(%arg0: i32) -> (i32, i32, i32) {
    %c0_i32 = arith.constant 0 : i32
    %c0_i32_0 = arith.constant 0 : i32
    %c0_i32_1 = arith.constant 0 : i32
    return %arg0, %c0_i32, %c0_i32_0 : i32, i32, i32
  }
  func.func @transform_1(%arg0: i32) -> (i32, i32) {
    %c0_i32 = arith.constant 0 : i32
    %c0_i32_0 = arith.constant 0 : i32
    %c0_i32_1 = arith.constant 0 : i32
    return %c0_i32, %c0_i32_0 : i32, i32
  }
  func.func @transform_2(%arg0: i32) -> (i32, i32) {
    %c0_i32 = arith.constant 0 : i32
    %c0_i32_0 = arith.constant 0 : i32
    %c0_i32_1 = arith.constant 0 : i32
    return %c0_i32, %c0_i32_0 : i32, i32
  }
  func.func @transform_3(%arg0: i32) -> (i32, i32) {
    %c0_i32 = arith.constant 0 : i32
    %c0_i32_0 = arith.constant 0 : i32
    %c0_i32_1 = arith.constant 0 : i32
    return %c0_i32, %c0_i32_0 : i32, i32
  }
  func.func @transform_4(%arg0: i32) -> (i32, i32) {
    %c0_i32 = arith.constant 0 : i32
    %c0_i32_0 = arith.constant 0 : i32
    %c0_i32_1 = arith.constant 0 : i32
    return %c0_i32, %c0_i32_0 : i32, i32
  }
  func.func @transform_5(%arg0: i32) -> (i32, i32) {
    %c0_i32 = arith.constant 0 : i32
    %c0_i32_0 = arith.constant 0 : i32
    %c0_i32_1 = arith.constant 0 : i32
    return %c0_i32, %c0_i32_0 : i32, i32
  }
  func.func @transform_6(%arg0: i32) -> (i32, i32) {
    %c0_i32 = arith.constant 0 : i32
    %c0_i32_0 = arith.constant 0 : i32
    %c0_i32_1 = arith.constant 0 : i32
    return %c0_i32, %c0_i32_0 : i32, i32
  }
  func.func @transform_7(%arg0: i32) -> (i32, i32, i32) {
    %c0_i32 = arith.constant 0 : i32
    %c0_i32_0 = arith.constant 0 : i32
    %c0_i32_1 = arith.constant 0 : i32
    return %arg0, %c0_i32, %c0_i32_0 : i32, i32, i32
  }
}

</mosaic_0001>

<llo_original>
// kernel: _lambda_.1
$region0: #{_lambda_.1}
  #allocation0 [shape = 'u32[]', space=smem, size = 0x4, offset = 0x4, fixed_abs, tag = 'smem constant byte address 0x4 - core index']
  #allocation1 [shape = 'u32[144,128]{1,0:T(1,128)}', space=vmem, size = 0x12000, scoped, tag = 'internal scratch']
  #allocation2 [shape = 'bf16[16,256]{1,0:T(16,128)(2,1)}', space=vmem, size = 0x2000, scoped, tag = 'scratch operand']
  #allocation3 [shape = 'bf16[16,256]{1,0:T(16,128)(2,1)}', space=vmem, size = 0x2000, scoped, tag = 'scratch operand']
  #allocation4 [shape = 'bf16[128,256]{1,0:T(16,128)(2,1)}', space=vmem, size = 0x10000, scoped, tag = 'scratch operand']
  #allocation5 [shape = 'f32[128,256]{1,0:T(8,128)}', space=vmem, size = 0x20000, scoped, tag = 'scratch operand']
  %s0 = inlined_call_operand.vmem [shape: f32[2,128,256], index: 0, kind: input, shape index: {}]
  %s1 = inlined_call_operand.vmem [shape: bf16[16,128], index: 1, kind: input, shape index: {}]
  %s2 = inlined_call_operand.vmem [shape: f32[16,1], index: 2, kind: input, shape index: {}]
  %s3 = inlined_call_operand.vmem [shape: bf16[16,128], index: 3, kind: input, shape index: {}]
  %s4 = inlined_call_operand.vmem [shape: f32[16,1], index: 4, kind: input, shape index: {}]
  %s5 = inlined_call_operand.vmem [shape: bf16[128,128], index: 5, kind: input, shape index: {}]
  %s6 = inlined_call_operand.vmem [shape: f32[128,1], index: 6, kind: input, shape index: {}]
  %s7 = inlined_call_operand.vmem [shape: f32[2,128,256], index: 7, kind: output, shape index: {}]
  %s8 = sld [smem:[#allocation0]]
  $region61: #{_lambda_.1} parent=0
    _
  %s10 = ssub.s32 1, %s8
  %s11 = scalar_select 0, %s10, %s8
  loop: start=0, step=1, limit=4
  $region2: #{_lambda_.1} parent=0 // loop_pre_header
    _
  $region3: #{_lambda_.1} parent=0 // loop_header
    %s13 = sphi 0, %s17
    %p14 = scmp.ge.s32.totalorder %s13, 4
    %s23 = sphi 0, %s25
    %s26 = sphi 0, %s23
    %s27 = sphi 0, %s26
    %s43 = sphi 0, %s27
    %s47 = sphi 0, %s47
    %s49 = sphi 0, %s47
    %s50 = sphi 0, %s49
    %s64 = sphi 0, %s50
    %s68 = sphi 0, %s68
    %s70 = sphi 0, %s68
    %s71 = sphi 0, %s70
    %s85 = sphi 0, %s71
    %s89 = sphi 0, %s89
    %s91 = sphi 0, %s89
    %s92 = sphi 0, %s91
    %s106 = sphi 0, %s92
    %s110 = sphi 0, %s110
    %s112 = sphi 0, %s110
    %s113 = sphi 0, %s112
    %s127 = sphi 0, %s113
    %s131 = sphi 0, %s131
    %s133 = sphi 0, %s131
    %s134 = sphi 0, %s133
    %s148 = sphi 0, %s134
    %s152 = sphi 0, %s152
    %s154 = sphi 0, %s152
    %s155 = sphi 0, %s154
    %s169 = sphi 0, %s155
    %s175 = sphi 0, %s177
    %s178 = sphi 0, %s175
    %s179 = sphi 0, %s178
    %s195 = sphi 0, %s179
  $region4: #{_lambda_.1} parent=0 // loop_header_branch
    %16 = sbr.rel (%p14) target = $region8
  $region5: #{_lambda_.1} parent=0 // loop_body
    %s18 = ssub.s32 %s13, 1
    %s19 = ssub.s32 %s13, 2
    %s20 = sadd.s32 %s13, 1
    %s21 = ssub.s32 %s13, %s20
    %p22 = scmp.eq.s32.totalorder %s21, 0
    %s24 = sadd.s32 %s23, 1
    %s25 = scalar_select %p22, %s23, %s24
    %p28 = pneg %p22
    %p29 = scmp.eq.s32.totalorder %s13, 1
    %p30 = por %p28, %p29
    %p31 = scmp.ne.s32.totalorder %s23, %s26
    %p32 = scmp.eq.s32.totalorder %s13, 0
    %p33 = por %p31, %p32
    %p34 = scmp.ne.s32.totalorder %s23, %s26
    %p35 = scmp.eq.s32.totalorder %s18, 1
    %p36 = por %p34, %p35
    %p37 = scmp.ne.s32.totalorder %s26, %s27
    %p38 = scmp.eq.s32.totalorder %s18, 0
    %p39 = por %p37, %p38
    %p40 = scmp.ne.s32.totalorder %s26, %s27
    %p41 = scmp.eq.s32.totalorder %s19, 1
    %p42 = por %p40, %p41
    %p44 = scmp.ne.s32.totalorder %s27, %s43
    %p45 = scmp.eq.s32.totalorder %s19, 0
    %p46 = por %p44, %p45
    %s48 = sadd.s32 %s47, 1
    %p51 = scmp.eq.s32.totalorder %s13, 1
    %p52 = scmp.ne.s32.totalorder %s47, %s49
    %p53 = scmp.eq.s32.totalorder %s13, 0
    %p54 = por %p52, %p53
    %p55 = scmp.ne.s32.totalorder %s47, %s49
    %p56 = scmp.eq.s32.totalorder %s18, 1
    %p57 = por %p55, %p56
    %p58 = scmp.ne.s32.totalorder %s49, %s50
    %p59 = scmp.eq.s32.totalorder %s18, 0
    %p60 = por %p58, %p59
    %p61 = scmp.ne.s32.totalorder %s49, %s50
    %p62 = scmp.eq.s32.totalorder %s19, 1
    %p63 = por %p61, %p62
    %p65 = scmp.ne.s32.totalorder %s50, %s64
    %p66 = scmp.eq.s32.totalorder %s19, 0
    %p67 = por %p65, %p66
    %s69 = sadd.s32 %s68, 1
    %p72 = scmp.eq.s32.totalorder %s13, 1
    %p73 = scmp.ne.s32.totalorder %s68, %s70
    %p74 = scmp.eq.s32.totalorder %s13, 0
    %p75 = por %p73, %p74
    %p76 = scmp.ne.s32.totalorder %s68, %s70
    %p77 = scmp.eq.s32.totalorder %s18, 1
    %p78 = por %p76, %p77
    %p79 = scmp.ne.s32.totalorder %s70, %s71
    %p80 = scmp.eq.s32.totalorder %s18, 0
    %p81 = por %p79, %p80
    %p82 = scmp.ne.s32.totalorder %s70, %s71
    %p83 = scmp.eq.s32.totalorder %s19, 1
    %p84 = por %p82, %p83
    %p86 = scmp.ne.s32.totalorder %s71, %s85
    %p87 = scmp.eq.s32.totalorder %s19, 0
    %p88 = por %p86, %p87
    %s90 = sadd.s32 %s89, 1
    %p93 = scmp.eq.s32.totalorder %s13, 1
    %p94 = scmp.ne.s32.totalorder %s89, %s91
    %p95 = scmp.eq.s32.totalorder %s13, 0
    %p96 = por %p94, %p95
    %p97 = scmp.ne.s32.totalorder %s89, %s91
    %p98 = scmp.eq.s32.totalorder %s18, 1
    %p99 = por %p97, %p98
    %p100 = scmp.ne.s32.totalorder %s91, %s92
    %p101 = scmp.eq.s32.totalorder %s18, 0
    %p102 = por %p100, %p101
    %p103 = scmp.ne.s32.totalorder %s91, %s92
    %p104 = scmp.eq.s32.totalorder %s19, 1
    %p105 = por %p103, %p104
    %p107 = scmp.ne.s32.totalorder %s92, %s106
    %p108 = scmp.eq.s32.totalorder %s19, 0
    %p109 = por %p107, %p108
    %s111 = sadd.s32 %s110, 1
    %p114 = scmp.eq.s32.totalorder %s13, 1
    %p115 = scmp.ne.s32.totalorder %s110, %s112
    %p116 = scmp.eq.s32.totalorder %s13, 0
    %p117 = por %p115, %p116
    %p118 = scmp.ne.s32.totalorder %s110, %s112
    %p119 = scmp.eq.s32.totalorder %s18, 1
    %p120 = por %p118, %p119
    %p121 = scmp.ne.s32.totalorder %s112, %s113
    %p122 = scmp.eq.s32.totalorder %s18, 0
    %p123 = por %p121, %p122
    %p124 = scmp.ne.s32.totalorder %s112, %s113
    %p125 = scmp.eq.s32.totalorder %s19, 1
    %p126 = por %p124, %p125
    %p128 = scmp.ne.s32.totalorder %s113, %s127
    %p129 = scmp.eq.s32.totalorder %s19, 0
    %p130 = por %p128, %p129
    %s132 = sadd.s32 %s131, 1
    %p135 = scmp.eq.s32.totalorder %s13, 1
    %p136 = scmp.ne.s32.totalorder %s131, %s133
    %p137 = scmp.eq.s32.totalorder %s13, 0
    %p138 = por %p136, %p137
    %p139 = scmp.ne.s32.totalorder %s131, %s133
    %p140 = scmp.eq.s32.totalorder %s18, 1
    %p141 = por %p139, %p140
    %p142 = scmp.ne.s32.totalorder %s133, %s134
    %p143 = scmp.eq.s32.totalorder %s18, 0
    %p144 = por %p142, %p143
    %p145 = scmp.ne.s32.totalorder %s133, %s134
    %p146 = scmp.eq.s32.totalorder %s19, 1
    %p147 = por %p145, %p146
    %p149 = scmp.ne.s32.totalorder %s134, %s148
    %p150 = scmp.eq.s32.totalorder %s19, 0
    %p151 = por %p149, %p150
    %s153 = sadd.s32 %s152, 1
    %p156 = scmp.eq.s32.totalorder %s13, 1
    %p157 = scmp.ne.s32.totalorder %s152, %s154
    %p158 = scmp.eq.s32.totalorder %s13, 0
    %p159 = por %p157, %p158
    %p160 = scmp.ne.s32.totalorder %s152, %s154
    %p161 = scmp.eq.s32.totalorder %s18, 1
    %p162 = por %p160, %p161
    %p163 = scmp.ne.s32.totalorder %s154, %s155
    %p164 = scmp.eq.s32.totalorder %s18, 0
    %p165 = por %p163, %p164
    %p166 = scmp.ne.s32.totalorder %s154, %s155
    %p167 = scmp.eq.s32.totalorder %s19, 1
    %p168 = por %p166, %p167
    %p170 = scmp.ne.s32.totalorder %s155, %s169
    %p171 = scmp.eq.s32.totalorder %s19, 0
    %p172 = por %p170, %p171
    %s173 = ssub.s32 %s13, %s20
    %p174 = scmp.eq.s32.totalorder %s173, 0
    %s176 = sadd.s32 %s175, 1
    %s177 = scalar_select %p174, %s175, %s176
    %p180 = pneg %p174
    %p181 = scmp.eq.s32.totalorder %s13, 1
    %p182 = por %p180, %p181
    %p183 = scmp.ne.s32.totalorder %s175, %s178
    %p184 = scmp.eq.s32.totalorder %s13, 0
    %p185 = por %p183, %p184
    %p186 = scmp.ne.s32.totalorder %s175, %s178
    %p187 = scmp.eq.s32.totalorder %s18, 1
    %p188 = por %p186, %p187
    %p189 = scmp.ne.s32.totalorder %s178, %s179
    %p190 = scmp.eq.s32.totalorder %s18, 0
    %p191 = por %p189, %p190
    %p192 = scmp.ne.s32.totalorder %s178, %s179
    %p193 = scmp.eq.s32.totalorder %s19, 1
    %p194 = por %p192, %p193
    %p196 = scmp.ne.s32.totalorder %s179, %s195
    %p197 = scmp.eq.s32.totalorder %s19, 0
    %p198 = por %p196, %p197
    %p199 = scmp.le.s32.totalorder 1, %s13
    %p200 = scmp.lt.s32.totalorder %s13, 3
    %p201 = pnand %p199, %p200
    %p202 = pneg %p201
    // Predicated region
    $region9: #{_lambda_.1} parent=5 // pred_check
      _
    $region10: #{_lambda_.1} parent=5 // pred_check_branch
      %204 = sbr.rel (%p201) target = $region12
    $region11: #{_lambda_.1} parent=5 // pred_region
      %s205 = ssub.s32 %s13, 1
      // Predicated region
      $region13: #{_lambda_.1} parent=11 // pred_check
        %p206 = pneg %p60
      $region14: #{_lambda_.1} parent=11 // pred_check_branch
        %208 = sbr.rel (%p206) target = $region16
      $region15: #{_lambda_.1} parent=11 // pred_region
        _
      $region16: #{_lambda_.1} parent=11 // pred_fallthru
        _
      // Predicated region
      $region17: #{_lambda_.1} parent=11 // pred_check
        %p209 = pneg %p81
      $region18: #{_lambda_.1} parent=11 // pred_check_branch
        %211 = sbr.rel (%p209) target = $region20
      $region19: #{_lambda_.1} parent=11 // pred_region
        _
      $region20: #{_lambda_.1} parent=11 // pred_fallthru
        _
      // Predicated region
      $region21: #{_lambda_.1} parent=11 // pred_check
        %p212 = pneg %p102
      $region22: #{_lambda_.1} parent=11 // pred_check_branch
        %214 = sbr.rel (%p212) target = $region24
      $region23: #{_lambda_.1} parent=11 // pred_region
        _
      $region24: #{_lambda_.1} parent=11 // pred_fallthru
        _
      // Predicated region
      $region25: #{_lambda_.1} parent=11 // pred_check
        %p215 = pneg %p123
      $region26: #{_lambda_.1} parent=11 // pred_check_branch
        %217 = sbr.rel (%p215) target = $region28
      $region27: #{_lambda_.1} parent=11 // pred_region
        _
      $region28: #{_lambda_.1} parent=11 // pred_fallthru
        _
      // Predicated region
      $region29: #{_lambda_.1} parent=11 // pred_check
        %p218 = pneg %p144
      $region30: #{_lambda_.1} parent=11 // pred_check_branch
        %220 = sbr.rel (%p218) target = $region32
      $region31: #{_lambda_.1} parent=11 // pred_region
        _
      $region32: #{_lambda_.1} parent=11 // pred_fallthru
        _
      // Predicated region
      $region33: #{_lambda_.1} parent=11 // pred_check
        %p221 = pneg %p165
      $region34: #{_lambda_.1} parent=11 // pred_check_branch
        %223 = sbr.rel (%p221) target = $region36
      $region35: #{_lambda_.1} parent=11 // pred_region
        _
      $region36: #{_lambda_.1} parent=11 // pred_fallthru
        _
    $region12: #{_lambda_.1} parent=5 // pred_fallthru
      _
    %p224 = scmp.lt.s32.totalorder %s13, 2
    // Predicated region
    $region37: #{_lambda_.1} parent=5 // pred_check
      %p225 = pneg %p224
    $region38: #{_lambda_.1} parent=5 // pred_check_branch
      %227 = sbr.rel (%p225) target = $region40
    $region39: #{_lambda_.1} parent=5 // pred_region
      // Predicated region
      $region41: #{_lambda_.1} parent=39 // pred_check
        %p228 = pneg %p33
      $region42: #{_lambda_.1} parent=39 // pred_check_branch
        %230 = sbr.rel (%p228) target = $region44
      $region43: #{_lambda_.1} parent=39 // pred_region
        %p231 = scmp.lt.s32.totalorder %s13, 1
        %s232 = scalar_select %p231, %s13, 1
        %s233 = smul.addr %s232, 32
        %s234 = smul.addr %s233, 8
        %s235 = scalar_lea.vmem %s0, %s234
      $region44: #{_lambda_.1} parent=39 // pred_fallthru
        _
    $region40: #{_lambda_.1} parent=5 // pred_fallthru
      _
    %p236 = scmp.le.s32.totalorder 1, %s13
    %p237 = scmp.lt.s32.totalorder %s13, 3
    %p238 = pnand %p236, %p237
    %p239 = pneg %p238
    // Predicated region
    $region45: #{_lambda_.1} parent=5 // pred_check
      _
    $region46: #{_lambda_.1} parent=5 // pred_check_branch
      %241 = sbr.rel (%p238) target = $region48
    $region47: #{_lambda_.1} parent=5 // pred_region
      %s242 = ssub.s32 %s13, 1
      %p243 = scmp.lt.s32.totalorder %s18, 1
      %s244 = scalar_select %p243, %s18, 1
      %s245 = smul.addr %s244, 32
      %s246 = smul.addr %s245, 8
      %s247 = scalar_lea.vmem %s0, %s246
      %p248 = pneg %p39
      %p249 = pneg %p36
      %p250 = pneg %p60
      %p251 = pneg %p57
      %p252 = pneg %p81
      %p253 = pneg %p78
      %p254 = pneg %p102
      %p255 = pneg %p99
      %p256 = pneg %p123
      %p257 = pneg %p120
      %p258 = pneg %p144
      %p259 = pneg %p141
      %p260 = pneg %p165
      %p261 = pneg %p162
      %p262 = pneg %p191
      %p263 = pneg %p188
      %p264 = scmp.lt.s32.totalorder %s18, 1
      %s265 = scalar_select %p264, %s18, 1
      %s266 = smul.addr %s265, 32
      %s267 = smul.addr %s266, 8
      %s268 = scalar_lea.vmem %s7, %s267
      %p269 = scmp.lt.s32.totalorder %s18, 1
      %s270 = scalar_select %p269, %s18, 1
      %s271 = smul.addr %s270, 32
      %s272 = smul.addr %s271, 8
      %s273 = scalar_lea.vmem %s0, %s272
      %p274 = scmp.lt.s32.totalorder %s18, 1
      %s275 = scalar_select %p274, %s18, 1
      %s276 = smul.addr %s275, 32
      %s277 = smul.addr %s276, 8
      %s278 = scalar_lea.vmem %s7, %s277
      %v280 = vld [vmem:[%s273] sm:$0xff]
      %v281 = vld [vmem:[%s273 + $0x8] sm:$0xff]
      %v282 = vld [vmem:[%s273 + $0x10] sm:$0xff]
      %v283 = vld [vmem:[%s273 + $0x18] sm:$0xff]
      %v284 = vld [vmem:[%s273 + $0x20] sm:$0xff]
      %v285 = vld [vmem:[%s273 + $0x28] sm:$0xff]
      %v286 = vld [vmem:[%s273 + $0x30] sm:$0xff]
      %v287 = vld [vmem:[%s273 + $0x38] sm:$0xff]
      %v288 = vld [vmem:[%s273 + $0x40] sm:$0xff]
      %v289 = vld [vmem:[%s273 + $0x48] sm:$0xff]
      %v290 = vld [vmem:[%s273 + $0x50] sm:$0xff]
      %v291 = vld [vmem:[%s273 + $0x58] sm:$0xff]
      %v292 = vld [vmem:[%s273 + $0x60] sm:$0xff]
      %v293 = vld [vmem:[%s273 + $0x68] sm:$0xff]
      %v294 = vld [vmem:[%s273 + $0x70] sm:$0xff]
      %v295 = vld [vmem:[%s273 + $0x78] sm:$0xff]
      %v296 = vld [vmem:[%s273 + $0x80] sm:$0xff]
      %v297 = vld [vmem:[%s273 + $0x88] sm:$0xff]
      %v298 = vld [vmem:[%s273 + $0x90] sm:$0xff]
      %v299 = vld [vmem:[%s273 + $0x98] sm:$0xff]
      %v300 = vld [vmem:[%s273 + $0xa0] sm:$0xff]
      %v301 = vld [vmem:[%s273 + $0xa8] sm:$0xff]
      %v302 = vld [vmem:[%s273 + $0xb0] sm:$0xff]
      %v303 = vld [vmem:[%s273 + $0xb8] sm:$0xff]
      %v304 = vld [vmem:[%s273 + $0xc0] sm:$0xff]
      %v305 = vld [vmem:[%s273 + $0xc8] sm:$0xff]
      %v306 = vld [vmem:[%s273 + $0xd0] sm:$0xff]
      %v307 = vld [vmem:[%s273 + $0xd8] sm:$0xff]
      %v308 = vld [vmem:[%s273 + $0xe0] sm:$0xff]
      %v309 = vld [vmem:[%s273 + $0xe8] sm:$0xff]
      %v310 = vld [vmem:[%s273 + $0xf0] sm:$0xff]
      %v311 = vld [vmem:[%s273 + $0xf8] sm:$0xff]
      %v312 = vpack.c.bf16 %v282, %v280
      %v313 = vpack.c.bf16 %v283, %v281
      %v314 = vpack.c.bf16 %v286, %v284
      %v315 = vpack.c.bf16 %v287, %v285
      %v316 = vpack.c.bf16 %v290, %v288
      %v317 = vpack.c.bf16 %v291, %v289
      %v318 = vpack.c.bf16 %v294, %v292
      %v319 = vpack.c.bf16 %v295, %v293
      %v320 = vpack.c.bf16 %v298, %v296
      %v321 = vpack.c.bf16 %v299, %v297
      %v322 = vpack.c.bf16 %v302, %v300
      %v323 = vpack.c.bf16 %v303, %v301
      %v324 = vpack.c.bf16 %v306, %v304
      %v325 = vpack.c.bf16 %v307, %v305
      %v326 = vpack.c.bf16 %v310, %v308
      %v327 = vpack.c.bf16 %v311, %v309
      %v328 = vld [vmem:[%s1] sm:$0xf]
      %v329 = vld [vmem:[%s1 + $0x4] sm:$0xf]
      %v330 = vld [vmem:[%s2] sm:$0xff]
      %v331 = vld [vmem:[%s2 + $0x8] sm:$0xff]
      %333 = vset.pattern.permute.xlu0 0
      %334 = vperm.xlu0 %333, %v330
      %v335 = vpop.permute.xlu0 %334
      %338 = vset.pattern.permute.xlu0 0
      %339 = vperm.xlu0 %338, %v331
      %v340 = vpop.permute.xlu0 %339
      %v344 = vunpack.c.l.b16 %v328
      %v345 = vunpack.c.l.b16 %v329
      %v346 = vpack.c.b16 %v345, %v344
      %348 = vmatprep.subr.bf16.mxu0 %v313
      %349 = vmatpush1.bf16.msra.mxu0 %v312
      %350 = vmatprep.subr.bf16.mxu0 %v315
      %351 = vmatpush1.bf16.msra.mxu0 %v314
      %352 = vmatprep.subr.bf16.mxu0 %v317
      %353 = vmatpush1.bf16.msra.mxu0 %v316
      %354 = vmatprep.subr.bf16.mxu0 %v319
      %355 = vmatpush1.bf16.msra.mxu0 %v318
      %356 = vmatprep.subr.bf16.mxu0 %v321
      %357 = vmatpush1.bf16.msra.mxu0 %v320
      %358 = vmatprep.subr.bf16.mxu0 %v323
      %359 = vmatpush1.bf16.msra.mxu0 %v322
      %360 = vmatprep.subr.bf16.mxu0 %v325
      %361 = vmatpush1.bf16.msra.mxu0 %v324
      %362 = vmatprep.subr.bf16.mxu0 %v327
      %363 = vmatpush1.bf16.msra.mxu0 %v326
      %364 = vmatprep.subr.bf16.mxu0 0
      %365 = vmatpush1.bf16.msra.mxu0 0
      %366 = vmatprep.subr.bf16.mxu0 0
      %367 = vmatpush1.bf16.msra.mxu0 0
      %368 = vmatprep.subr.bf16.mxu0 0
      %369 = vmatpush1.bf16.msra.mxu0 0
      %370 = vmatprep.subr.bf16.mxu0 0
      %371 = vmatpush1.bf16.msra.mxu0 0
      %372 = vmatprep.subr.bf16.mxu0 0
      %373 = vmatpush1.bf16.msra.mxu0 0
      %374 = vmatprep.subr.bf16.mxu0 0
      %375 = vmatpush1.bf16.msra.mxu0 0
      %376 = vmatprep.subr.bf16.mxu0 0
      %377 = vmatpush1.bf16.msra.mxu0 0
      %378 = vmatprep.subr.bf16.mxu0 0
      %379 = vmatpush1.bf16.msra.mxu0 0
      %380 = vmatprep.mubr.bf16.mxu0 0
      %381 = vmatmul.mubr.bf16.gmra.mrb[0].mxu0 %v346
      %v382 = vpop.f32.mrb[0].mxu0
      %v383 = vadd.f32 %v335, %v382
      %v384 = vpop.f32.mrb[0].mxu0
      %v385 = vadd.f32 %v335, %v384
      %v386 = vpop.f32.mrb[0].mxu0
      %v387 = vadd.f32 %v340, %v386
      %v388 = vpop.f32.mrb[0].mxu0
      %v389 = vadd.f32 %v340, %v388
      %390 = vdwg.mxu0
      %v391 = vpack.c.bf16 %v387, %v383
      %v392 = vpack.c.bf16 %v389, %v385
      %393 = vst [vmem:[#allocation2] sm:$0xff] %v391
      %394 = vst [vmem:[#allocation2 + $0x8] sm:$0xff] %v392
      %v395 = vld [vmem:[%s3] sm:$0xf]
      %v396 = vld [vmem:[%s3 + $0x4] sm:$0xf]
      %v397 = vld [vmem:[%s4] sm:$0xff]
      %v398 = vld [vmem:[%s4 + $0x8] sm:$0xff]
      %400 = vset.pattern.permute.xlu0 0
      %401 = vperm.xlu0 %400, %v397
      %v402 = vpop.permute.xlu0 %401
      %405 = vset.pattern.permute.xlu0 0
      %406 = vperm.xlu0 %405, %v398
      %v407 = vpop.permute.xlu0 %406
      %v411 = vunpack.c.l.b16 %v395
      %v412 = vunpack.c.l.b16 %v396
      %v413 = vpack.c.b16 %v412, %v411
      %415 = vmatprep.subr.bf16.mxu0 %v313
      %416 = vmatpush1.bf16.msra.mxu0 %v312
      %417 = vmatprep.subr.bf16.mxu0 %v315
      %418 = vmatpush1.bf16.msra.mxu0 %v314
      %419 = vmatprep.subr.bf16.mxu0 %v317
      %420 = vmatpush1.bf16.msra.mxu0 %v316
      %421 = vmatprep.subr.bf16.mxu0 %v319
      %422 = vmatpush1.bf16.msra.mxu0 %v318
      %423 = vmatprep.subr.bf16.mxu0 %v321
      %424 = vmatpush1.bf16.msra.mxu0 %v320
      %425 = vmatprep.subr.bf16.mxu0 %v323
      %426 = vmatpush1.bf16.msra.mxu0 %v322
      %427 = vmatprep.subr.bf16.mxu0 %v325
      %428 = vmatpush1.bf16.msra.mxu0 %v324
      %429 = vmatprep.subr.bf16.mxu0 %v327
      %430 = vmatpush1.bf16.msra.mxu0 %v326
      %431 = vmatprep.subr.bf16.mxu0 0
      %432 = vmatpush1.bf16.msra.mxu0 0
      %433 = vmatprep.subr.bf16.mxu0 0
      %434 = vmatpush1.bf16.msra.mxu0 0
      %435 = vmatprep.subr.bf16.mxu0 0
      %436 = vmatpush1.bf16.msra.mxu0 0
      %437 = vmatprep.subr.bf16.mxu0 0
      %438 = vmatpush1.bf16.msra.mxu0 0
      %439 = vmatprep.subr.bf16.mxu0 0
      %440 = vmatpush1.bf16.msra.mxu0 0
      %441 = vmatprep.subr.bf16.mxu0 0
      %442 = vmatpush1.bf16.msra.mxu0 0
      %443 = vmatprep.subr.bf16.mxu0 0
      %444 = vmatpush1.bf16.msra.mxu0 0
      %445 = vmatprep.subr.bf16.mxu0 0
      %446 = vmatpush1.bf16.msra.mxu0 0
      %447 = vmatprep.mubr.bf16.mxu0 0
      %448 = vmatmul.mubr.bf16.gmra.mrb[0].mxu0 %v413
      %v449 = vpop.f32.mrb[0].mxu0
      %v450 = vadd.f32 %v402, %v449
      %v451 = vpop.f32.mrb[0].mxu0
      %v452 = vadd.f32 %v402, %v451
      %v453 = vpop.f32.mrb[0].mxu0
      %v454 = vadd.f32 %v407, %v453
      %v455 = vpop.f32.mrb[0].mxu0
      %v456 = vadd.f32 %v407, %v455
      %457 = vdwg.mxu0
      %v458 = vpack.c.bf16 %v454, %v450
      %v459 = vpack.c.bf16 %v456, %v452
      %460 = vst [vmem:[#allocation3] sm:$0xff] %v458
      %461 = vst [vmem:[#allocation3 + $0x8] sm:$0xff] %v459
      %v462 = vld [vmem:[%s5] sm:$0xf]
      %v463 = vld [vmem:[%s5 + $0x4] sm:$0xf]
      %v464 = vld [vmem:[%s5 + $0x8] sm:$0xf]
      %v465 = vld [vmem:[%s5 + $0xc] sm:$0xf]
      %v466 = vld [vmem:[%s5 + $0x10] sm:$0xf]
      %v467 = vld [vmem:[%s5 + $0x14] sm:$0xf]
      %v468 = vld [vmem:[%s5 + $0x18] sm:$0xf]
      %v469 = vld [vmem:[%s5 + $0x1c] sm:$0xf]
      %v470 = vld [vmem:[%s5 + $0x20] sm:$0xf]
      %v471 = vld [vmem:[%s5 + $0x24] sm:$0xf]
      %v472 = vld [vmem:[%s5 + $0x28] sm:$0xf]
      %v473 = vld [vmem:[%s5 + $0x2c] sm:$0xf]
      %v474 = vld [vmem:[%s5 + $0x30] sm:$0xf]
      %v475 = vld [vmem:[%s5 + $0x34] sm:$0xf]
      %v476 = vld [vmem:[%s5 + $0x38] sm:$0xf]
      %v477 = vld [vmem:[%s5 + $0x3c] sm:$0xf]
      %v478 = vld [vmem:[%s6] sm:$0xff]
      %v479 = vld [vmem:[%s6 + $0x8] sm:$0xff]
      %v480 = vld [vmem:[%s6 + $0x10] sm:$0xff]
      %v481 = vld [vmem:[%s6 + $0x18] sm:$0xff]
      %v482 = vld [vmem:[%s6 + $0x20] sm:$0xff]
      %v483 = vld [vmem:[%s6 + $0x28] sm:$0xff]
      %v484 = vld [vmem:[%s6 + $0x30] sm:$0xff]
      %v485 = vld [vmem:[%s6 + $0x38] sm:$0xff]
      %v486 = vld [vmem:[%s6 + $0x40] sm:$0xff]
      %v487 = vld [vmem:[%s6 + $0x48] sm:$0xff]
      %v488 = vld [vmem:[%s6 + $0x50] sm:$0xff]
      %v489 = vld [vmem:[%s6 + $0x58] sm:$0xff]
      %v490 = vld [vmem:[%s6 + $0x60] sm:$0xff]
      %v491 = vld [vmem:[%s6 + $0x68] sm:$0xff]
      %v492 = vld [vmem:[%s6 + $0x70] sm:$0xff]
      %v493 = vld [vmem:[%s6 + $0x78] sm:$0xff]
      %495 = vset.pattern.permute.xlu0 0
      %496 = vperm.xlu0 %495, %v478
      %v497 = vpop.permute.xlu0 %496
      %500 = vset.pattern.permute.xlu0 0
      %501 = vperm.xlu0 %500, %v479
      %v502 = vpop.permute.xlu0 %501
      %505 = vset.pattern.permute.xlu0 0
      %506 = vperm.xlu0 %505, %v480
      %v507 = vpop.permute.xlu0 %506
      %510 = vset.pattern.permute.xlu0 0
      %511 = vperm.xlu0 %510, %v481
      %v512 = vpop.permute.xlu0 %511
      %515 = vset.pattern.permute.xlu0 0
      %516 = vperm.xlu0 %515, %v482
      %v517 = vpop.permute.xlu0 %516
      %520 = vset.pattern.permute.xlu0 0
      %521 = vperm.xlu0 %520, %v483
      %v522 = vpop.permute.xlu0 %521
      %525 = vset.pattern.permute.xlu0 0
      %526 = vperm.xlu0 %525, %v484
      %v527 = vpop.permute.xlu0 %526
      %530 = vset.pattern.permute.xlu0 0
      %531 = vperm.xlu0 %530, %v485
      %v532 = vpop.permute.xlu0 %531
      %535 = vset.pattern.permute.xlu0 0
      %536 = vperm.xlu0 %535, %v486
      %v537 = vpop.permute.xlu0 %536
      %540 = vset.pattern.permute.xlu0 0
      %541 = vperm.xlu0 %540, %v487
      %v542 = vpop.permute.xlu0 %541
      %545 = vset.pattern.permute.xlu0 0
      %546 = vperm.xlu0 %545, %v488
      %v547 = vpop.permute.xlu0 %546
      %550 = vset.pattern.permute.xlu0 0
      %551 = vperm.xlu0 %550, %v489
      %v552 = vpop.permute.xlu0 %551
      %555 = vset.pattern.permute.xlu0 0
      %556 = vperm.xlu0 %555, %v490
      %v557 = vpop.permute.xlu0 %556
      %560 = vset.pattern.permute.xlu0 0
      %561 = vperm.xlu0 %560, %v491
      %v562 = vpop.permute.xlu0 %561
      %565 = vset.pattern.permute.xlu0 0
      %566 = vperm.xlu0 %565, %v492
      %v567 = vpop.permute.xlu0 %566
      %570 = vset.pattern.permute.xlu0 0
      %571 = vperm.xlu0 %570, %v493
      %v572 = vpop.permute.xlu0 %571
      %v590 = vunpack.c.l.b16 %v462
      %v591 = vunpack.c.l.b16 %v463
      %v592 = vunpack.c.l.b16 %v464
      %v593 = vunpack.c.l.b16 %v465
      %v594 = vunpack.c.l.b16 %v466
      %v595 = vunpack.c.l.b16 %v467
      %v596 = vunpack.c.l.b16 %v468
      %v597 = vunpack.c.l.b16 %v469
      %v598 = vunpack.c.l.b16 %v470
      %v599 = vunpack.c.l.b16 %v471
      %v600 = vunpack.c.l.b16 %v472
      %v601 = vunpack.c.l.b16 %v473
      %v602 = vunpack.c.l.b16 %v474
      %v603 = vunpack.c.l.b16 %v475
      %v604 = vunpack.c.l.b16 %v476
      %v605 = vunpack.c.l.b16 %v477
      %v606 = vpack.c.b16 %v591, %v590
      %v607 = vpack.c.b16 %v593, %v592
      %v608 = vpack.c.b16 %v595, %v594
      %v609 = vpack.c.b16 %v597, %v596
      %v610 = vpack.c.b16 %v599, %v598
      %v611 = vpack.c.b16 %v601, %v600
      %v612 = vpack.c.b16 %v603, %v602
      %v613 = vpack.c.b16 %v605, %v604
      %622 = vmatprep.subr.bf16.mxu0 %v313
      %623 = vmatpush1.bf16.msra.mxu0 %v312
      %624 = vmatprep.subr.bf16.mxu0 %v315
      %625 = vmatpush1.bf16.msra.mxu0 %v314
      %626 = vmatprep.subr.bf16.mxu0 %v317
      %627 = vmatpush1.bf16.msra.mxu0 %v316
      %628 = vmatprep.subr.bf16.mxu0 %v319
      %629 = vmatpush1.bf16.msra.mxu0 %v318
      %630 = vmatprep.subr.bf16.mxu0 %v321
      %631 = vmatpush1.bf16.msra.mxu0 %v320
      %632 = vmatprep.subr.bf16.mxu0 %v323
      %633 = vmatpush1.bf16.msra.mxu0 %v322
      %634 = vmatprep.subr.bf16.mxu0 %v325
      %635 = vmatpush1.bf16.msra.mxu0 %v324
      %636 = vmatprep.subr.bf16.mxu0 %v327
      %637 = vmatpush1.bf16.msra.mxu0 %v326
      %638 = vmatprep.subr.bf16.mxu0 0
      %639 = vmatpush1.bf16.msra.mxu0 0
      %640 = vmatprep.subr.bf16.mxu0 0
      %641 = vmatpush1.bf16.msra.mxu0 0
      %642 = vmatprep.subr.bf16.mxu0 0
      %643 = vmatpush1.bf16.msra.mxu0 0
      %644 = vmatprep.subr.bf16.mxu0 0
      %645 = vmatpush1.bf16.msra.mxu0 0
      %646 = vmatprep.subr.bf16.mxu0 0
      %647 = vmatpush1.bf16.msra.mxu0 0
      %648 = vmatprep.subr.bf16.mxu0 0
      %649 = vmatpush1.bf16.msra.mxu0 0
      %650 = vmatprep.subr.bf16.mxu0 0
      %651 = vmatpush1.bf16.msra.mxu0 0
      %652 = vmatprep.subr.bf16.mxu0 0
      %653 = vmatpush1.bf16.msra.mxu0 0
      %654 = vmatprep.mubr.bf16.mxu0 0
      %655 = vmatmul.mubr.bf16.gmra.mrb[0].mxu0 %v606
      %v656 = vpop.f32.mrb[0].mxu0
      %v657 = vadd.f32 %v497, %v656
      %v658 = vpop.f32.mrb[0].mxu0
      %v659 = vadd.f32 %v497, %v658
      %v660 = vpop.f32.mrb[0].mxu0
      %v661 = vadd.f32 %v502, %v660
      %v662 = vpop.f32.mrb[0].mxu0
      %v663 = vadd.f32 %v502, %v662
      %664 = vmatprep.mubr.bf16.mxu0 0
      %665 = vmatmul.mubr.bf16.gmra.mrb[0].mxu0 %v607
      %v666 = vpop.f32.mrb[0].mxu0
      %v667 = vadd.f32 %v507, %v666
      %v668 = vpop.f32.mrb[0].mxu0
      %v669 = vadd.f32 %v507, %v668
      %v670 = vpop.f32.mrb[0].mxu0
      %v671 = vadd.f32 %v512, %v670
      %v672 = vpop.f32.mrb[0].mxu0
      %v673 = vadd.f32 %v512, %v672
      %674 = vmatprep.mubr.bf16.mxu0 0
      %675 = vmatmul.mubr.bf16.gmra.mrb[0].mxu0 %v608
      %v676 = vpop.f32.mrb[0].mxu0
      %v677 = vadd.f32 %v517, %v676
      %v678 = vpop.f32.mrb[0].mxu0
      %v679 = vadd.f32 %v517, %v678
      %v680 = vpop.f32.mrb[0].mxu0
      %v681 = vadd.f32 %v522, %v680
      %v682 = vpop.f32.mrb[0].mxu0
      %v683 = vadd.f32 %v522, %v682
      %684 = vmatprep.mubr.bf16.mxu0 0
      %685 = vmatmul.mubr.bf16.gmra.mrb[0].mxu0 %v609
      %v686 = vpop.f32.mrb[0].mxu0
      %v687 = vadd.f32 %v527, %v686
      %v688 = vpop.f32.mrb[0].mxu0
      %v689 = vadd.f32 %v527, %v688
      %v690 = vpop.f32.mrb[0].mxu0
      %v691 = vadd.f32 %v532, %v690
      %v692 = vpop.f32.mrb[0].mxu0
      %v693 = vadd.f32 %v532, %v692
      %694 = vmatprep.mubr.bf16.mxu0 0
      %695 = vmatmul.mubr.bf16.gmra.mrb[0].mxu0 %v610
      %v696 = vpop.f32.mrb[0].mxu0
      %v697 = vadd.f32 %v537, %v696
      %v698 = vpop.f32.mrb[0].mxu0
      %v699 = vadd.f32 %v537, %v698
      %v700 = vpop.f32.mrb[0].mxu0
      %v701 = vadd.f32 %v542, %v700
      %v702 = vpop.f32.mrb[0].mxu0
      %v703 = vadd.f32 %v542, %v702
      %704 = vmatprep.mubr.bf16.mxu0 0
      %705 = vmatmul.mubr.bf16.gmra.mrb[0].mxu0 %v611
      %v706 = vpop.f32.mrb[0].mxu0
      %v707 = vadd.f32 %v547, %v706
      %v708 = vpop.f32.mrb[0].mxu0
      %v709 = vadd.f32 %v547, %v708
      %v710 = vpop.f32.mrb[0].mxu0
      %v711 = vadd.f32 %v552, %v710
      %v712 = vpop.f32.mrb[0].mxu0
      %v713 = vadd.f32 %v552, %v712
      %714 = vmatprep.mubr.bf16.mxu0 0
      %715 = vmatmul.mubr.bf16.gmra.mrb[0].mxu0 %v612
      %v716 = vpop.f32.mrb[0].mxu0
      %v717 = vadd.f32 %v557, %v716
      %v718 = vpop.f32.mrb[0].mxu0
      %v719 = vadd.f32 %v557, %v718
      %v720 = vpop.f32.mrb[0].mxu0
      %v721 = vadd.f32 %v562, %v720
      %v722 = vpop.f32.mrb[0].mxu0
      %v723 = vadd.f32 %v562, %v722
      %724 = vmatprep.mubr.bf16.mxu0 0
      %725 = vmatmul.mubr.bf16.gmra.mrb[0].mxu0 %v613
      %v726 = vpop.f32.mrb[0].mxu0
      %v727 = vadd.f32 %v567, %v726
      %v728 = vpop.f32.mrb[0].mxu0
      %v729 = vadd.f32 %v567, %v728
      %v730 = vpop.f32.mrb[0].mxu0
      %v731 = vadd.f32 %v572, %v730
      %v732 = vpop.f32.mrb[0].mxu0
      %v733 = vadd.f32 %v572, %v732
      %734 = vdwg.mxu0
      %v735 = vpack.c.bf16 %v661, %v657
      %v736 = vpack.c.bf16 %v663, %v659
      %v737 = vpack.c.bf16 %v671, %v667
      %v738 = vpack.c.bf16 %v673, %v669
      %v739 = vpack.c.bf16 %v681, %v677
      %v740 = vpack.c.bf16 %v683, %v679
      %v741 = vpack.c.bf16 %v691, %v687
      %v742 = vpack.c.bf16 %v693, %v689
      %v743 = vpack.c.bf16 %v701, %v697
      %v744 = vpack.c.bf16 %v703, %v699
      %v745 = vpack.c.bf16 %v711, %v707
      %v746 = vpack.c.bf16 %v713, %v709
      %v747 = vpack.c.bf16 %v721, %v717
      %v748 = vpack.c.bf16 %v723, %v719
      %v749 = vpack.c.bf16 %v731, %v727
      %v750 = vpack.c.bf16 %v733, %v729
      %751 = vst [vmem:[#allocation4] sm:$0xff] %v735
      %752 = vst [vmem:[#allocation4 + $0x8] sm:$0xff] %v736
      %753 = vst [vmem:[#allocation4 + $0x10] sm:$0xff] %v737
      %754 = vst [vmem:[#allocation4 + $0x18] sm:$0xff] %v738
      %755 = vst [vmem:[#allocation4 + $0x20] sm:$0xff] %v739
      %756 = vst [vmem:[#allocation4 + $0x28] sm:$0xff] %v740
      %757 = vst [vmem:[#allocation4 + $0x30] sm:$0xff] %v741
      %758 = vst [vmem:[#allocation4 + $0x38] sm:$0xff] %v742
      %759 = vst [vmem:[#allocation4 + $0x40] sm:$0xff] %v743
      %760 = vst [vmem:[#allocation4 + $0x48] sm:$0xff] %v744
      %761 = vst [vmem:[#allocation4 + $0x50] sm:$0xff] %v745
      %762 = vst [vmem:[#allocation4 + $0x58] sm:$0xff] %v746
      %763 = vst [vmem:[#allocation4 + $0x60] sm:$0xff] %v747
      %764 = vst [vmem:[#allocation4 + $0x68] sm:$0xff] %v748
      %765 = vst [vmem:[#allocation4 + $0x70] sm:$0xff] %v749
      %766 = vst [vmem:[#allocation4 + $0x78] sm:$0xff] %v750
      %767 = vst [vmem:[#allocation5] sm:$0xff] 0.0
      %768 = vst [vmem:[#allocation5 + $0x8] sm:$0xff] 0.0
      %769 = vst [vmem:[#allocation5 + $0x10] sm:$0xff] 0.0
      %770 = vst [vmem:[#allocation5 + $0x18] sm:$0xff] 0.0
      %771 = vst [vmem:[#allocation5 + $0x20] sm:$0xff] 0.0
      %772 = vst [vmem:[#allocation5 + $0x28] sm:$0xff] 0.0
      %773 = vst [vmem:[#allocation5 + $0x30] sm:$0xff] 0.0
      %774 = vst [vmem:[#allocation5 + $0x38] sm:$0xff] 0.0
      %775 = vst [vmem:[#allocation5 + $0x40] sm:$0xff] 0.0
      %776 = vst [vmem:[#allocation5 + $0x48] sm:$0xff] 0.0
      %777 = vst [vmem:[#allocation5 + $0x50] sm:$0xff] 0.0
      %778 = vst [vmem:[#allocation5 + $0x58] sm:$0xff] 0.0
      %779 = vst [vmem:[#allocation5 + $0x60] sm:$0xff] 0.0
      %780 = vst [vmem:[#allocation5 + $0x68] sm:$0xff] 0.0
      %781 = vst [vmem:[#allocation5 + $0x70] sm:$0xff] 0.0
      %782 = vst [vmem:[#allocation5 + $0x78] sm:$0xff] 0.0
      %783 = vst [vmem:[#allocation5 + $0x80] sm:$0xff] 0.0
      %784 = vst [vmem:[#allocation5 + $0x88] sm:$0xff] 0.0
      %785 = vst [vmem:[#allocation5 + $0x90] sm:$0xff] 0.0
      %786 = vst [vmem:[#allocation5 + $0x98] sm:$0xff] 0.0
      %787 = vst [vmem:[#allocation5 + $0xa0] sm:$0xff] 0.0
      %788 = vst [vmem:[#allocation5 + $0xa8] sm:$0xff] 0.0
      %789 = vst [vmem:[#allocation5 + $0xb0] sm:$0xff] 0.0
      %790 = vst [vmem:[#allocation5 + $0xb8] sm:$0xff] 0.0
      %791 = vst [vmem:[#allocation5 + $0xc0] sm:$0xff] 0.0
      %792 = vst [vmem:[#allocation5 + $0xc8] sm:$0xff] 0.0
      %793 = vst [vmem:[#allocation5 + $0xd0] sm:$0xff] 0.0
      %794 = vst [vmem:[#allocation5 + $0xd8] sm:$0xff] 0.0
      %795 = vst [vmem:[#allocation5 + $0xe0] sm:$0xff] 0.0
      %796 = vst [vmem:[#allocation5 + $0xe8] sm:$0xff] 0.0
      %797 = vst [vmem:[#allocation5 + $0xf0] sm:$0xff] 0.0
      %798 = vst [vmem:[#allocation5 + $0xf8] sm:$0xff] 0.0
      %v799 = vld [vmem:[#allocation2] sm:$0xff]
      %v800 = vld [vmem:[#allocation3] sm:$0xff]
      %v801 = vld [vmem:[#allocation3 + $0x8] sm:$0xff]
      %802 = vxpose.xlu0.c.b16.start [1/8] %v799, 128
      %803 = vxpose.xlu0.c.b16.cont [2/8] 0, 128
      %804 = vxpose.xlu0.c.b16.cont [3/8] 0, 128
      %805 = vxpose.xlu0.c.b16.cont [4/8] 0, 128
      %806 = vxpose.xlu0.c.b16.cont [5/8] 0, 128
      %807 = vxpose.xlu0.c.b16.cont [6/8] 0, 128
      %808 = vxpose.xlu0.c.b16.cont [7/8] 0, 128
      %809 = vxpose.xlu0.c.b16.end [8/8] 0, 128
      %v810 = vpop.trf.xlu0
      %v811 = vpop.trf.xlu0
      %v812 = vpop.trf.xlu0
      %v813 = vpop.trf.xlu0
      %v814 = vpop.trf.xlu0
      %v815 = vpop.trf.xlu0
      %v816 = vpop.trf.xlu0
      %v817 = vpop.trf.xlu0
      %vm818 = vcmask 130048
      %v820 = vsel %vm818, %v810, 0
      %v823 = vsel %vm818, %v811, 0
      %v826 = vsel %vm818, %v812, 0
      %v829 = vsel %vm818, %v813, 0
      %v832 = vsel %vm818, %v814, 0
      %v835 = vsel %vm818, %v815, 0
      %v838 = vsel %vm818, %v816, 0
      %v841 = vsel %vm818, %v817, 0
      %843 = vmatprep.subr.bf16.mxu0 %v801
      %844 = vmatpush1.bf16.msra.mxu0 %v800
      %845 = vmatprep.subr.bf16.mxu0 0
      %846 = vmatpush1.bf16.msra.mxu0 0
      %847 = vmatprep.subr.bf16.mxu0 0
      %848 = vmatpush1.bf16.msra.mxu0 0
      %849 = vmatprep.subr.bf16.mxu0 0
      %850 = vmatpush1.bf16.msra.mxu0 0
      %851 = vmatprep.subr.bf16.mxu0 0
      %852 = vmatpush1.bf16.msra.mxu0 0
      %853 = vmatprep.subr.bf16.mxu0 0
      %854 = vmatpush1.bf16.msra.mxu0 0
      %855 = vmatprep.subr.bf16.mxu0 0
      %856 = vmatpush1.bf16.msra.mxu0 0
      %857 = vmatprep.subr.bf16.mxu0 0
      %858 = vmatpush1.bf16.msra.mxu0 0
      %859 = vmatprep.subr.bf16.mxu0 0
      %860 = vmatpush1.bf16.msra.mxu0 0
      %861 = vmatprep.subr.bf16.mxu0 0
      %862 = vmatpush1.bf16.msra.mxu0 0
      %863 = vmatprep.subr.bf16.mxu0 0
      %864 = vmatpush1.bf16.msra.mxu0 0
      %865 = vmatprep.subr.bf16.mxu0 0
      %866 = vmatpush1.bf16.msra.mxu0 0
      %867 = vmatprep.subr.bf16.mxu0 0
      %868 = vmatpush1.bf16.msra.mxu0 0
      %869 = vmatprep.subr.bf16.mxu0 0
      %870 = vmatpush1.bf16.msra.mxu0 0
      %871 = vmatprep.subr.bf16.mxu0 0
      %872 = vmatpush1.bf16.msra.mxu0 0
      %873 = vmatprep.subr.bf16.mxu0 0
      %874 = vmatpush1.bf16.msra.mxu0 0
      %875 = vmatprep.mubr.bf16.mxu0 0
      %876 = vmatmul.mubr.bf16.gmra.mrb[0].mxu0 %v820
      %v877 = vpop.f32.mrb[0].mxu0
      %v878 = vadd.f32 0.0, %v877
      %v879 = vpop.f32.mrb[0].mxu0
      %v880 = vadd.f32 0.0, %v879
      %v881 = vpop.f32.mrb[0].mxu0
      %v882 = vadd.f32 0.0, %v881
      %v883 = vpop.f32.mrb[0].mxu0
      %v884 = vadd.f32 0.0, %v883
      %885 = vmatprep.mubr.bf16.mxu0 0
      %886 = vmatmul.mubr.bf16.gmra.mrb[0].mxu0 %v823
      %v887 = vpop.f32.mrb[0].mxu0
      %v888 = vadd.f32 0.0, %v887
      %v889 = vpop.f32.mrb[0].mxu0
      %v890 = vadd.f32 0.0, %v889
      %v891 = vpop.f32.mrb[0].mxu0
      %v892 = vadd.f32 0.0, %v891
      %v893 = vpop.f32.mrb[0].mxu0
      %v894 = vadd.f32 0.0, %v893
      %895 = vmatprep.mubr.bf16.mxu0 0
      %896 = vmatmul.mubr.bf16.gmra.mrb[0].mxu0 %v826
      %v897 = vpop.f32.mrb[0].mxu0
      %v898 = vadd.f32 0.0, %v897
      %v899 = vpop.f32.mrb[0].mxu0
      %v900 = vadd.f32 0.0, %v899
      %v901 = vpop.f32.mrb[0].mxu0
      %v902 = vadd.f32 0.0, %v901
      %v903 = vpop.f32.mrb[0].mxu0
      %v904 = vadd.f32 0.0, %v903
      %905 = vmatprep.mubr.bf16.mxu0 0
      %906 = vmatmul.mubr.bf16.gmra.mrb[0].mxu0 %v829
      %v907 = vpop.f32.mrb[0].mxu0
      %v908 = vadd.f32 0.0, %v907
      %v909 = vpop.f32.mrb[0].mxu0
      %v910 = vadd.f32 0.0, %v909
      %v911 = vpop.f32.mrb[0].mxu0
      %v912 = vadd.f32 0.0, %v911
      %v913 = vpop.f32.mrb[0].mxu0
      %v914 = vadd.f32 0.0, %v913
      %915 = vmatprep.mubr.bf16.mxu0 0
      %916 = vmatmul.mubr.bf16.gmra.mrb[0].mxu0 %v832
      %v917 = vpop.f32.mrb[0].mxu0
      %v918 = vadd.f32 0.0, %v917
      %v919 = vpop.f32.mrb[0].mxu0
      %v920 = vadd.f32 0.0, %v919
      %v921 = vpop.f32.mrb[0].mxu0
      %v922 = vadd.f32 0.0, %v921
      %v923 = vpop.f32.mrb[0].mxu0
      %v924 = vadd.f32 0.0, %v923
      %925 = vmatprep.mubr.bf16.mxu0 0
      %926 = vmatmul.mubr.bf16.gmra.mrb[0].mxu0 %v835
      %v927 = vpop.f32.mrb[0].mxu0
      %v928 = vadd.f32 0.0, %v927
      %v929 = vpop.f32.mrb[0].mxu0
      %v930 = vadd.f32 0.0, %v929
      %v931 = vpop.f32.mrb[0].mxu0
      %v932 = vadd.f32 0.0, %v931
      %v933 = vpop.f32.mrb[0].mxu0
      %v934 = vadd.f32 0.0, %v933
      %935 = vmatprep.mubr.bf16.mxu0 0
      %936 = vmatmul.mubr.bf16.gmra.mrb[0].mxu0 %v838
      %v937 = vpop.f32.mrb[0].mxu0
      %v938 = vadd.f32 0.0, %v937
      %v939 = vpop.f32.mrb[0].mxu0
      %v940 = vadd.f32 0.0, %v939
      %v941 = vpop.f32.mrb[0].mxu0
      %v942 = vadd.f32 0.0, %v941
      %v943 = vpop.f32.mrb[0].mxu0
      %v944 = vadd.f32 0.0, %v943
      %945 = vmatprep.mubr.bf16.mxu0 0
      %946 = vmatmul.mubr.bf16.gmra.mrb[0].mxu0 %v841
      %v947 = vpop.f32.mrb[0].mxu0
      %v948 = vadd.f32 0.0, %v947
      %v949 = vpop.f32.mrb[0].mxu0
      %v950 = vadd.f32 0.0, %v949
      %v951 = vpop.f32.mrb[0].mxu0
      %v952 = vadd.f32 0.0, %v951
      %v953 = vpop.f32.mrb[0].mxu0
      %v954 = vadd.f32 0.0, %v953
      %955 = vdwg.mxu0
      %v956 = vmax.f32 %v878, %v880
      %957 = vmax.xlane.f32.xlu0 %v956
      %v958 = vpop.xlane.xlu0 %957
      %v959 = vmax.f32 %v882, %v884
      %960 = vmax.xlane.f32.xlu0 %v959
      %v961 = vpop.xlane.xlu0 %960
      %v962 = vmax.f32 %v888, %v890
      %963 = vmax.xlane.f32.xlu0 %v962
      %v964 = vpop.xlane.xlu0 %963
      %v965 = vmax.f32 %v892, %v894
      %966 = vmax.xlane.f32.xlu0 %v965
      %v967 = vpop.xlane.xlu0 %966
      %v968 = vmax.f32 %v898, %v900
      %969 = vmax.xlane.f32.xlu0 %v968
      %v970 = vpop.xlane.xlu0 %969
      %v971 = vmax.f32 %v902, %v904
      %972 = vmax.xlane.f32.xlu0 %v971
      %v973 = vpop.xlane.xlu0 %972
      %v974 = vmax.f32 %v908, %v910
      %975 = vmax.xlane.f32.xlu0 %v974
      %v976 = vpop.xlane.xlu0 %975
      %v977 = vmax.f32 %v912, %v914
      %978 = vmax.xlane.f32.xlu0 %v977
      %v979 = vpop.xlane.xlu0 %978
      %v980 = vmax.f32 %v918, %v920
      %981 = vmax.xlane.f32.xlu0 %v980
      %v982 = vpop.xlane.xlu0 %981
      %v983 = vmax.f32 %v922, %v924
      %984 = vmax.xlane.f32.xlu0 %v983
      %v985 = vpop.xlane.xlu0 %984
      %v986 = vmax.f32 %v928, %v930
      %987 = vmax.xlane.f32.xlu0 %v986
      %v988 = vpop.xlane.xlu0 %987
      %v989 = vmax.f32 %v932, %v934
      %990 = vmax.xlane.f32.xlu0 %v989
      %v991 = vpop.xlane.xlu0 %990
      %v992 = vmax.f32 %v938, %v940
      %993 = vmax.xlane.f32.xlu0 %v992
      %v994 = vpop.xlane.xlu0 %993
      %v995 = vmax.f32 %v942, %v944
      %996 = vmax.xlane.f32.xlu0 %v995
      %v997 = vpop.xlane.xlu0 %996
      %v998 = vmax.f32 %v948, %v950
      %999 = vmax.xlane.f32.xlu0 %v998
      %v1000 = vpop.xlane.xlu0 %999
      %v1001 = vmax.f32 %v952, %v954
      %1002 = vmax.xlane.f32.xlu0 %v1001
      %v1003 = vpop.xlane.xlu0 %1002
      %v1004 = vsub.f32 %v878, %v958
      %v1005 = vsub.f32 %v880, %v958
      %v1006 = vsub.f32 %v882, %v961
      %v1007 = vsub.f32 %v884, %v961
      %v1008 = vsub.f32 %v888, %v964
      %v1009 = vsub.f32 %v890, %v964
      %v1010 = vsub.f32 %v892, %v967
      %v1011 = vsub.f32 %v894, %v967
      %v1012 = vsub.f32 %v898, %v970
      %v1013 = vsub.f32 %v900, %v970
      %v1014 = vsub.f32 %v902, %v973
      %v1015 = vsub.f32 %v904, %v973
      %v1016 = vsub.f32 %v908, %v976
      %v1017 = vsub.f32 %v910, %v976
      %v1018 = vsub.f32 %v912, %v979
      %v1019 = vsub.f32 %v914, %v979
      %v1020 = vsub.f32 %v918, %v982
      %v1021 = vsub.f32 %v920, %v982
      %v1022 = vsub.f32 %v922, %v985
      %v1023 = vsub.f32 %v924, %v985
      %v1024 = vsub.f32 %v928, %v988
      %v1025 = vsub.f32 %v930, %v988
      %v1026 = vsub.f32 %v932, %v991
      %v1027 = vsub.f32 %v934, %v991
      %v1028 = vsub.f32 %v938, %v994
      %v1029 = vsub.f32 %v940, %v994
      %v1030 = vsub.f32 %v942, %v997
      %v1031 = vsub.f32 %v944, %v997
      %v1032 = vsub.f32 %v948, %v1000
      %v1033 = vsub.f32 %v950, %v1000
      %v1034 = vsub.f32 %v952, %v1003
      %v1035 = vsub.f32 %v954, %v1003
      %v1036 = vmul.f32 %v1004, 1.442695
      %v1037 = vpow.pop %v1036
      %v1038 = vmul.f32 %v1005, 1.442695
      %v1039 = vpow.pop %v1038
      %v1040 = vmul.f32 %v1006, 1.442695
      %v1041 = vpow.pop %v1040
      %v1042 = vmul.f32 %v1007, 1.442695
      %v1043 = vpow.pop %v1042
      %v1044 = vmul.f32 %v1008, 1.442695
      %v1045 = vpow.pop %v1044
      %v1046 = vmul.f32 %v1009, 1.442695
      %v1047 = vpow.pop %v1046
      %v1048 = vmul.f32 %v1010, 1.442695
      %v1049 = vpow.pop %v1048
      %v1050 = vmul.f32 %v1011, 1.442695
      %v1051 = vpow.pop %v1050
      %v1052 = vmul.f32 %v1012, 1.442695
      %v1053 = vpow.pop %v1052
      %v1054 = vmul.f32 %v1013, 1.442695
      %v1055 = vpow.pop %v1054
      %v1056 = vmul.f32 %v1014, 1.442695
      %v1057 = vpow.pop %v1056
      %v1058 = vmul.f32 %v1015, 1.442695
      %v1059 = vpow.pop %v1058
      %v1060 = vmul.f32 %v1016, 1.442695
      %v1061 = vpow.pop %v1060
      %v1062 = vmul.f32 %v1017, 1.442695
      %v1063 = vpow.pop %v1062
      %v1064 = vmul.f32 %v1018, 1.442695
      %v1065 = vpow.pop %v1064
      %v1066 = vmul.f32 %v1019, 1.442695
      %v1067 = vpow.pop %v1066
      %v1068 = vmul.f32 %v1020, 1.442695
      %v1069 = vpow.pop %v1068
      %v1070 = vmul.f32 %v1021, 1.442695
      %v1071 = vpow.pop %v1070
      %v1072 = vmul.f32 %v1022, 1.442695
      %v1073 = vpow.pop %v1072
      %v1074 = vmul.f32 %v1023, 1.442695
      %v1075 = vpow.pop %v1074
      %v1076 = vmul.f32 %v1024, 1.442695
      %v1077 = vpow.pop %v1076
      %v1078 = vmul.f32 %v1025, 1.442695
      %v1079 = vpow.pop %v1078
      %v1080 = vmul.f32 %v1026, 1.442695
      %v1081 = vpow.pop %v1080
      %v1082 = vmul.f32 %v1027, 1.442695
      %v1083 = vpow.pop %v1082
      %v1084 = vmul.f32 %v1028, 1.442695
      %v1085 = vpow.pop %v1084
      %v1086 = vmul.f32 %v1029, 1.442695
      %v1087 = vpow.pop %v1086
      %v1088 = vmul.f32 %v1030, 1.442695
      %v1089 = vpow.pop %v1088
      %v1090 = vmul.f32 %v1031, 1.442695
      %v1091 = vpow.pop %v1090
      %v1092 = vmul.f32 %v1032, 1.442695
      %v1093 = vpow.pop %v1092
      %v1094 = vmul.f32 %v1033, 1.442695
      %v1095 = vpow.pop %v1094
      %v1096 = vmul.f32 %v1034, 1.442695
      %v1097 = vpow.pop %v1096
      %v1098 = vmul.f32 %v1035, 1.442695
      %v1099 = vpow.pop %v1098
      %v1100 = vadd.f32 %v1037, %v1039
      %1101 = vadd.xlane.f32.xlu0 %v1100
      %v1102 = vpop.xlane.xlu0 %1101
      %v1103 = vadd.f32 %v1041, %v1043
      %1104 = vadd.xlane.f32.xlu0 %v1103
      %v1105 = vpop.xlane.xlu0 %1104
      %v1106 = vadd.f32 %v1045, %v1047
      %1107 = vadd.xlane.f32.xlu0 %v1106
      %v1108 = vpop.xlane.xlu0 %1107
      %v1109 = vadd.f32 %v1049, %v1051
      %1110 = vadd.xlane.f32.xlu0 %v1109
      %v1111 = vpop.xlane.xlu0 %1110
      %v1112 = vadd.f32 %v1053, %v1055
      %1113 = vadd.xlane.f32.xlu0 %v1112
      %v1114 = vpop.xlane.xlu0 %1113
      %v1115 = vadd.f32 %v1057, %v1059
      %1116 = vadd.xlane.f32.xlu0 %v1115
      %v1117 = vpop.xlane.xlu0 %1116
      %v1118 = vadd.f32 %v1061, %v1063
      %1119 = vadd.xlane.f32.xlu0 %v1118
      %v1120 = vpop.xlane.xlu0 %1119
      %v1121 = vadd.f32 %v1065, %v1067
      %1122 = vadd.xlane.f32.xlu0 %v1121
      %v1123 = vpop.xlane.xlu0 %1122
      %v1124 = vadd.f32 %v1069, %v1071
      %1125 = vadd.xlane.f32.xlu0 %v1124
      %v1126 = vpop.xlane.xlu0 %1125
      %v1127 = vadd.f32 %v1073, %v1075
      %1128 = vadd.xlane.f32.xlu0 %v1127
      %v1129 = vpop.xlane.xlu0 %1128
      %v1130 = vadd.f32 %v1077, %v1079
      %1131 = vadd.xlane.f32.xlu0 %v1130
      %v1132 = vpop.xlane.xlu0 %1131
      %v1133 = vadd.f32 %v1081, %v1083
      %1134 = vadd.xlane.f32.xlu0 %v1133
      %v1135 = vpop.xlane.xlu0 %1134
      %v1136 = vadd.f32 %v1085, %v1087
      %1137 = vadd.xlane.f32.xlu0 %v1136
      %v1138 = vpop.xlane.xlu0 %1137
      %v1139 = vadd.f32 %v1089, %v1091
      %1140 = vadd.xlane.f32.xlu0 %v1139
      %v1141 = vpop.xlane.xlu0 %1140
      %v1142 = vadd.f32 %v1093, %v1095
      %1143 = vadd.xlane.f32.xlu0 %v1142
      %v1144 = vpop.xlane.xlu0 %1143
      %v1145 = vadd.f32 %v1097, %v1099
      %1146 = vadd.xlane.f32.xlu0 %v1145
      %v1147 = vpop.xlane.xlu0 %1146
      %v1148 = vrcp.pop %v1102
      %v1149 = vrcp.pop %v1105
      %v1150 = vrcp.pop %v1108
      %v1151 = vrcp.pop %v1111
      %v1152 = vrcp.pop %v1114
      %v1153 = vrcp.pop %v1117
      %v1154 = vrcp.pop %v1120
      %v1155 = vrcp.pop %v1123
      %v1156 = vrcp.pop %v1126
      %v1157 = vrcp.pop %v1129
      %v1158 = vrcp.pop %v1132
      %v1159 = vrcp.pop %v1135
      %v1160 = vrcp.pop %v1138
      %v1161 = vrcp.pop %v1141
      %v1162 = vrcp.pop %v1144
      %v1163 = vrcp.pop %v1147
      %v1164 = vmul.f32 %v1037, %v1148
      %v1165 = vmul.f32 %v1039, %v1148
      %v1166 = vmul.f32 %v1041, %v1149
      %v1167 = vmul.f32 %v1043, %v1149
      %v1168 = vmul.f32 %v1045, %v1150
      %v1169 = vmul.f32 %v1047, %v1150
      %v1170 = vmul.f32 %v1049, %v1151
      %v1171 = vmul.f32 %v1051, %v1151
      %v1172 = vmul.f32 %v1053, %v1152
      %v1173 = vmul.f32 %v1055, %v1152
      %v1174 = vmul.f32 %v1057, %v1153
      %v1175 = vmul.f32 %v1059, %v1153
      %v1176 = vmul.f32 %v1061, %v1154
      %v1177 = vmul.f32 %v1063, %v1154
      %v1178 = vmul.f32 %v1065, %v1155
      %v1179 = vmul.f32 %v1067, %v1155
      %v1180 = vmul.f32 %v1069, %v1156
      %v1181 = vmul.f32 %v1071, %v1156
      %v1182 = vmul.f32 %v1073, %v1157
      %v1183 = vmul.f32 %v1075, %v1157
      %v1184 = vmul.f32 %v1077, %v1158
      %v1185 = vmul.f32 %v1079, %v1158
      %v1186 = vmul.f32 %v1081, %v1159
      %v1187 = vmul.f32 %v1083, %v1159
      %v1188 = vmul.f32 %v1085, %v1160
      %v1189 = vmul.f32 %v1087, %v1160
      %v1190 = vmul.f32 %v1089, %v1161
      %v1191 = vmul.f32 %v1091, %v1161
      %v1192 = vmul.f32 %v1093, %v1162
      %v1193 = vmul.f32 %v1095, %v1162
      %v1194 = vmul.f32 %v1097, %v1163
      %v1195 = vmul.f32 %v1099, %v1163
      %v1196 = vld [vmem:[#allocation4] sm:$0xff]
      %v1197 = vld [vmem:[#allocation4 + $0x10] sm:$0xff]
      %v1198 = vld [vmem:[#allocation4 + $0x20] sm:$0xff]
      %v1199 = vld [vmem:[#allocation4 + $0x30] sm:$0xff]
      %v1200 = vld [vmem:[#allocation4 + $0x40] sm:$0xff]
      %v1201 = vld [vmem:[#allocation4 + $0x50] sm:$0xff]
      %v1202 = vld [vmem:[#allocation4 + $0x60] sm:$0xff]
      %v1203 = vld [vmem:[#allocation4 + $0x70] sm:$0xff]
      %v1204 = vld [vmem:[#allocation5] sm:$0xff]
      %v1205 = vld [vmem:[#allocation5 + $0x8] sm:$0xff]
      %v1206 = vld [vmem:[#allocation5 + $0x10] sm:$0xff]
      %v1207 = vld [vmem:[#allocation5 + $0x18] sm:$0xff]
      %v1208 = vld [vmem:[#allocation5 + $0x20] sm:$0xff]
      %v1209 = vld [vmem:[#allocation5 + $0x28] sm:$0xff]
      %v1210 = vld [vmem:[#allocation5 + $0x30] sm:$0xff]
      %v1211 = vld [vmem:[#allocation5 + $0x38] sm:$0xff]
      %v1212 = vld [vmem:[#allocation5 + $0x40] sm:$0xff]
      %v1213 = vld [vmem:[#allocation5 + $0x48] sm:$0xff]
      %v1214 = vld [vmem:[#allocation5 + $0x50] sm:$0xff]
      %v1215 = vld [vmem:[#allocation5 + $0x58] sm:$0xff]
      %v1216 = vld [vmem:[#allocation5 + $0x60] sm:$0xff]
      %v1217 = vld [vmem:[#allocation5 + $0x68] sm:$0xff]
      %v1218 = vld [vmem:[#allocation5 + $0x70] sm:$0xff]
      %v1219 = vld [vmem:[#allocation5 + $0x78] sm:$0xff]
      %v1220 = vld [vmem:[#allocation5 + $0x80] sm:$0xff]
      %v1221 = vld [vmem:[#allocation5 + $0x88] sm:$0xff]
      %v1222 = vld [vmem:[#allocation5 + $0x90] sm:$0xff]
      %v1223 = vld [vmem:[#allocation5 + $0x98] sm:$0xff]
      %v1224 = vld [vmem:[#allocation5 + $0xa0] sm:$0xff]
      %v1225 = vld [vmem:[#allocation5 + $0xa8] sm:$0xff]
      %v1226 = vld [vmem:[#allocation5 + $0xb0] sm:$0xff]
      %v1227 = vld [vmem:[#allocation5 + $0xb8] sm:$0xff]
      %v1228 = vld [vmem:[#allocation5 + $0xc0] sm:$0xff]
      %v1229 = vld [vmem:[#allocation5 + $0xc8] sm:$0xff]
      %v1230 = vld [vmem:[#allocation5 + $0xd0] sm:$0xff]
      %v1231 = vld [vmem:[#allocation5 + $0xd8] sm:$0xff]
      %v1232 = vld [vmem:[#allocation5 + $0xe0] sm:$0xff]
      %v1233 = vld [vmem:[#allocation5 + $0xe8] sm:$0xff]
      %v1234 = vld [vmem:[#allocation5 + $0xf0] sm:$0xff]
      %v1235 = vld [vmem:[#allocation5 + $0xf8] sm:$0xff]
      %v1236 = vpack.c.bf16 %v1166, %v1164
      %v1237 = vpack.c.bf16 %v1167, %v1165
      %v1238 = vpack.c.bf16 %v1170, %v1168
      %v1239 = vpack.c.bf16 %v1171, %v1169
      %v1240 = vpack.c.bf16 %v1174, %v1172
      %v1241 = vpack.c.bf16 %v1175, %v1173
      %v1242 = vpack.c.bf16 %v1178, %v1176
      %v1243 = vpack.c.bf16 %v1179, %v1177
      %v1244 = vpack.c.bf16 %v1182, %v1180
      %v1245 = vpack.c.bf16 %v1183, %v1181
      %v1246 = vpack.c.bf16 %v1186, %v1184
      %v1247 = vpack.c.bf16 %v1187, %v1185
      %v1248 = vpack.c.bf16 %v1190, %v1188
      %v1249 = vpack.c.bf16 %v1191, %v1189
      %v1250 = vpack.c.bf16 %v1194, %v1192
      %v1251 = vpack.c.bf16 %v1195, %v1193
      %1252 = vmatprep.subr.bf16.mxu0 %v1237
      %1253 = vmatpush1.bf16.msra.mxu0 %v1236
      %1254 = vmatprep.subr.bf16.mxu0 %v1239
      %1255 = vmatpush1.bf16.msra.mxu0 %v1238
      %1256 = vmatprep.subr.bf16.mxu0 %v1241
      %1257 = vmatpush1.bf16.msra.mxu0 %v1240
      %1258 = vmatprep.subr.bf16.mxu0 %v1243
      %1259 = vmatpush1.bf16.msra.mxu0 %v1242
      %1260 = vmatprep.subr.bf16.mxu0 %v1245
      %1261 = vmatpush1.bf16.msra.mxu0 %v1244
      %1262 = vmatprep.subr.bf16.mxu0 %v1247
      %1263 = vmatpush1.bf16.msra.mxu0 %v1246
      %1264 = vmatprep.subr.bf16.mxu0 %v1249
      %1265 = vmatpush1.bf16.msra.mxu0 %v1248
      %1266 = vmatprep.subr.bf16.mxu0 %v1251
      %1267 = vmatpush1.bf16.msra.mxu0 %v1250
      %1268 = vmatprep.subr.bf16.mxu0 0
      %1269 = vmatpush1.bf16.msra.mxu0 0
      %1270 = vmatprep.subr.bf16.mxu0 0
      %1271 = vmatpush1.bf16.msra.mxu0 0
      %1272 = vmatprep.subr.bf16.mxu0 0
      %1273 = vmatpush1.bf16.msra.mxu0 0
      %1274 = vmatprep.subr.bf16.mxu0 0
      %1275 = vmatpush1.bf16.msra.mxu0 0
      %1276 = vmatprep.subr.bf16.mxu0 0
      %1277 = vmatpush1.bf16.msra.mxu0 0
      %1278 = vmatprep.subr.bf16.mxu0 0
      %1279 = vmatpush1.bf16.msra.mxu0 0
      %1280 = vmatprep.subr.bf16.mxu0 0
      %1281 = vmatpush1.bf16.msra.mxu0 0
      %1282 = vmatprep.subr.bf16.mxu0 0
      %1283 = vmatpush1.bf16.msra.mxu0 0
      %1284 = vmatprep.mubr.bf16.mxu0 0
      %1285 = vmatmul.mubr.bf16.gmra.mrb[0].mxu0 %v1196
      %v1286 = vpop.f32.mrb[0].mxu0
      %v1287 = vadd.f32 0.0, %v1286
      %v1288 = vpop.f32.mrb[0].mxu0
      %v1289 = vadd.f32 0.0, %v1288
      %v1290 = vpop.f32.mrb[0].mxu0
      %v1291 = vadd.f32 0.0, %v1290
      %v1292 = vpop.f32.mrb[0].mxu0
      %v1293 = vadd.f32 0.0, %v1292
      %1294 = vmatprep.mubr.bf16.mxu0 0
      %1295 = vmatmul.mubr.bf16.gmra.mrb[0].mxu0 %v1197
      %v1296 = vpop.f32.mrb[0].mxu0
      %v1297 = vadd.f32 0.0, %v1296
      %v1298 = vpop.f32.mrb[0].mxu0
      %v1299 = vadd.f32 0.0, %v1298
      %v1300 = vpop.f32.mrb[0].mxu0
      %v1301 = vadd.f32 0.0, %v1300
      %v1302 = vpop.f32.mrb[0].mxu0
      %v1303 = vadd.f32 0.0, %v1302
      %1304 = vmatprep.mubr.bf16.mxu0 0
      %1305 = vmatmul.mubr.bf16.gmra.mrb[0].mxu0 %v1198
      %v1306 = vpop.f32.mrb[0].mxu0
      %v1307 = vadd.f32 0.0, %v1306
      %v1308 = vpop.f32.mrb[0].mxu0
      %v1309 = vadd.f32 0.0, %v1308
      %v1310 = vpop.f32.mrb[0].mxu0
      %v1311 = vadd.f32 0.0, %v1310
      %v1312 = vpop.f32.mrb[0].mxu0
      %v1313 = vadd.f32 0.0, %v1312
      %1314 = vmatprep.mubr.bf16.mxu0 0
      %1315 = vmatmul.mubr.bf16.gmra.mrb[0].mxu0 %v1199
      %v1316 = vpop.f32.mrb[0].mxu0
      %v1317 = vadd.f32 0.0, %v1316
      %v1318 = vpop.f32.mrb[0].mxu0
      %v1319 = vadd.f32 0.0, %v1318
      %v1320 = vpop.f32.mrb[0].mxu0
      %v1321 = vadd.f32 0.0, %v1320
      %v1322 = vpop.f32.mrb[0].mxu0
      %v1323 = vadd.f32 0.0, %v1322
      %1324 = vmatprep.mubr.bf16.mxu0 0
      %1325 = vmatmul.mubr.bf16.gmra.mrb[0].mxu0 %v1200
      %v1326 = vpop.f32.mrb[0].mxu0
      %v1327 = vadd.f32 0.0, %v1326
      %v1328 = vpop.f32.mrb[0].mxu0
      %v1329 = vadd.f32 0.0, %v1328
      %v1330 = vpop.f32.mrb[0].mxu0
      %v1331 = vadd.f32 0.0, %v1330
      %v1332 = vpop.f32.mrb[0].mxu0
      %v1333 = vadd.f32 0.0, %v1332
      %1334 = vmatprep.mubr.bf16.mxu0 0
      %1335 = vmatmul.mubr.bf16.gmra.mrb[0].mxu0 %v1201
      %v1336 = vpop.f32.mrb[0].mxu0
      %v1337 = vadd.f32 0.0, %v1336
      %v1338 = vpop.f32.mrb[0].mxu0
      %v1339 = vadd.f32 0.0, %v1338
      %v1340 = vpop.f32.mrb[0].mxu0
      %v1341 = vadd.f32 0.0, %v1340
      %v1342 = vpop.f32.mrb[0].mxu0
      %v1343 = vadd.f32 0.0, %v1342
      %1344 = vmatprep.mubr.bf16.mxu0 0
      %1345 = vmatmul.mubr.bf16.gmra.mrb[0].mxu0 %v1202
      %v1346 = vpop.f32.mrb[0].mxu0
      %v1347 = vadd.f32 0.0, %v1346
      %v1348 = vpop.f32.mrb[0].mxu0
      %v1349 = vadd.f32 0.0, %v1348
      %v1350 = vpop.f32.mrb[0].mxu0
      %v1351 = vadd.f32 0.0, %v1350
      %v1352 = vpop.f32.mrb[0].mxu0
      %v1353 = vadd.f32 0.0, %v1352
      %1354 = vmatprep.mubr.bf16.mxu0 0
      %1355 = vmatmul.mubr.bf16.gmra.mrb[0].mxu0 %v1203
      %v1356 = vpop.f32.mrb[0].mxu0
      %v1357 = vadd.f32 0.0, %v1356
      %v1358 = vpop.f32.mrb[0].mxu0
      %v1359 = vadd.f32 0.0, %v1358
      %v1360 = vpop.f32.mrb[0].mxu0
      %v1361 = vadd.f32 0.0, %v1360
      %v1362 = vpop.f32.mrb[0].mxu0
      %v1363 = vadd.f32 0.0, %v1362
      %1364 = vdwg.mxu0
      %v1365 = vadd.f32 %v1204, %v1287
      %v1366 = vadd.f32 %v1205, %v1289
      %v1367 = vadd.f32 %v1206, %v1291
      %v1368 = vadd.f32 %v1207, %v1293
      %v1369 = vadd.f32 %v1208, %v1297
      %v1370 = vadd.f32 %v1209, %v1299
      %v1371 = vadd.f32 %v1210, %v1301
      %v1372 = vadd.f32 %v1211, %v1303
      %v1373 = vadd.f32 %v1212, %v1307
      %v1374 = vadd.f32 %v1213, %v1309
      %v1375 = vadd.f32 %v1214, %v1311
      %v1376 = vadd.f32 %v1215, %v1313
      %v1377 = vadd.f32 %v1216, %v1317
      %v1378 = vadd.f32 %v1217, %v1319
      %v1379 = vadd.f32 %v1218, %v1321
      %v1380 = vadd.f32 %v1219, %v1323
      %v1381 = vadd.f32 %v1220, %v1327
      %v1382 = vadd.f32 %v1221, %v1329
      %v1383 = vadd.f32 %v1222, %v1331
      %v1384 = vadd.f32 %v1223, %v1333
      %v1385 = vadd.f32 %v1224, %v1337
      %v1386 = vadd.f32 %v1225, %v1339
      %v1387 = vadd.f32 %v1226, %v1341
      %v1388 = vadd.f32 %v1227, %v1343
      %v1389 = vadd.f32 %v1228, %v1347
      %v1390 = vadd.f32 %v1229, %v1349
      %v1391 = vadd.f32 %v1230, %v1351
      %v1392 = vadd.f32 %v1231, %v1353
      %v1393 = vadd.f32 %v1232, %v1357
      %v1394 = vadd.f32 %v1233, %v1359
      %v1395 = vadd.f32 %v1234, %v1361
      %v1396 = vadd.f32 %v1235, %v1363
      %1397 = vst [vmem:[#allocation5] sm:$0xff] %v1365
      %1398 = vst [vmem:[#allocation5 + $0x8] sm:$0xff] %v1366
      %1399 = vst [vmem:[#allocation5 + $0x10] sm:$0xff] %v1367
      %1400 = vst [vmem:[#allocation5 + $0x18] sm:$0xff] %v1368
      %1401 = vst [vmem:[#allocation5 + $0x20] sm:$0xff] %v1369
      %1402 = vst [vmem:[#allocation5 + $0x28] sm:$0xff] %v1370
      %1403 = vst [vmem:[#allocation5 + $0x30] sm:$0xff] %v1371
      %1404 = vst [vmem:[#allocation5 + $0x38] sm:$0xff] %v1372
      %1405 = vst [vmem:[#allocation5 + $0x40] sm:$0xff] %v1373
      %1406 = vst [vmem:[#allocation5 + $0x48] sm:$0xff] %v1374
      %1407 = vst [vmem:[#allocation5 + $0x50] sm:$0xff] %v1375
      %1408 = vst [vmem:[#allocation5 + $0x58] sm:$0xff] %v1376
      %1409 = vst [vmem:[#allocation5 + $0x60] sm:$0xff] %v1377
      %1410 = vst [vmem:[#allocation5 + $0x68] sm:$0xff] %v1378
      %1411 = vst [vmem:[#allocation5 + $0x70] sm:$0xff] %v1379
      %1412 = vst [vmem:[#allocation5 + $0x78] sm:$0xff] %v1380
      %1413 = vst [vmem:[#allocation5 + $0x80] sm:$0xff] %v1381
      %1414 = vst [vmem:[#allocation5 + $0x88] sm:$0xff] %v1382
      %1415 = vst [vmem:[#allocation5 + $0x90] sm:$0xff] %v1383
      %1416 = vst [vmem:[#allocation5 + $0x98] sm:$0xff] %v1384
      %1417 = vst [vmem:[#allocation5 + $0xa0] sm:$0xff] %v1385
      %1418 = vst [vmem:[#allocation5 + $0xa8] sm:$0xff] %v1386
      %1419 = vst [vmem:[#allocation5 + $0xb0] sm:$0xff] %v1387
      %1420 = vst [vmem:[#allocation5 + $0xb8] sm:$0xff] %v1388
      %1421 = vst [vmem:[#allocation5 + $0xc0] sm:$0xff] %v1389
      %1422 = vst [vmem:[#allocation5 + $0xc8] sm:$0xff] %v1390
      %1423 = vst [vmem:[#allocation5 + $0xd0] sm:$0xff] %v1391
      %1424 = vst [vmem:[#allocation5 + $0xd8] sm:$0xff] %v1392
      %1425 = vst [vmem:[#allocation5 + $0xe0] sm:$0xff] %v1393
      %1426 = vst [vmem:[#allocation5 + $0xe8] sm:$0xff] %v1394
      %1427 = vst [vmem:[#allocation5 + $0xf0] sm:$0xff] %v1395
      %1428 = vst [vmem:[#allocation5 + $0xf8] sm:$0xff] %v1396
      %s1429 = scalar_lea.vmem [#allocation2], 8
      %v1430 = vld [vmem:[%s1429] sm:$0xff]
      %v1431 = vld [vmem:[#allocation3] sm:$0xff]
      %v1432 = vld [vmem:[#allocation3 + $0x8] sm:$0xff]
      %1433 = vxpose.xlu0.c.b16.start [1/8] %v1430, 128
      %1434 = vxpose.xlu0.c.b16.cont [2/8] 0, 128
      %1435 = vxpose.xlu0.c.b16.cont [3/8] 0, 128
      %1436 = vxpose.xlu0.c.b16.cont [4/8] 0, 128
      %1437 = vxpose.xlu0.c.b16.cont [5/8] 0, 128
      %1438 = vxpose.xlu0.c.b16.cont [6/8] 0, 128
      %1439 = vxpose.xlu0.c.b16.cont [7/8] 0, 128
      %1440 = vxpose.xlu0.c.b16.end [8/8] 0, 128
      %v1441 = vpop.trf.xlu0
      %v1442 = vpop.trf.xlu0
      %v1443 = vpop.trf.xlu0
      %v1444 = vpop.trf.xlu0
      %v1445 = vpop.trf.xlu0
      %v1446 = vpop.trf.xlu0
      %v1447 = vpop.trf.xlu0
      %v1448 = vpop.trf.xlu0
      %v1450 = vsel %vm818, %v1441, 0
      %v1453 = vsel %vm818, %v1442, 0
      %v1456 = vsel %vm818, %v1443, 0
      %v1459 = vsel %vm818, %v1444, 0
      %v1462 = vsel %vm818, %v1445, 0
      %v1465 = vsel %vm818, %v1446, 0
      %v1468 = vsel %vm818, %v1447, 0
      %v1471 = vsel %vm818, %v1448, 0
      %1473 = vmatprep.subr.bf16.mxu0 %v1432
      %1474 = vmatpush1.bf16.msra.mxu0 %v1431
      %1475 = vmatprep.subr.bf16.mxu0 0
      %1476 = vmatpush1.bf16.msra.mxu0 0
      %1477 = vmatprep.subr.bf16.mxu0 0
      %1478 = vmatpush1.bf16.msra.mxu0 0
      %1479 = vmatprep.subr.bf16.mxu0 0
      %1480 = vmatpush1.bf16.msra.mxu0 0
      %1481 = vmatprep.subr.bf16.mxu0 0
      %1482 = vmatpush1.bf16.msra.mxu0 0
      %1483 = vmatprep.subr.bf16.mxu0 0
      %1484 = vmatpush1.bf16.msra.mxu0 0
      %1485 = vmatprep.subr.bf16.mxu0 0
      %1486 = vmatpush1.bf16.msra.mxu0 0
      %1487 = vmatprep.subr.bf16.mxu0 0
      %1488 = vmatpush1.bf16.msra.mxu0 0
      %1489 = vmatprep.subr.bf16.mxu0 0
      %1490 = vmatpush1.bf16.msra.mxu0 0
      %1491 = vmatprep.subr.bf16.mxu0 0
      %1492 = vmatpush1.bf16.msra.mxu0 0
      %1493 = vmatprep.subr.bf16.mxu0 0
      %1494 = vmatpush1.bf16.msra.mxu0 0
      %1495 = vmatprep.subr.bf16.mxu0 0
      %1496 = vmatpush1.bf16.msra.mxu0 0
      %1497 = vmatprep.subr.bf16.mxu0 0
      %1498 = vmatpush1.bf16.msra.mxu0 0
      %1499 = vmatprep.subr.bf16.mxu0 0
      %1500 = vmatpush1.bf16.msra.mxu0 0
      %1501 = vmatprep.subr.bf16.mxu0 0
      %1502 = vmatpush1.bf16.msra.mxu0 0
      %1503 = vmatprep.subr.bf16.mxu0 0
      %1504 = vmatpush1.bf16.msra.mxu0 0
      %1505 = vmatprep.mubr.bf16.mxu0 0
      %1506 = vmatmul.mubr.bf16.gmra.mrb[0].mxu0 %v1450
      %v1507 = vpop.f32.mrb[0].mxu0
      %v1508 = vadd.f32 0.0, %v1507
      %v1509 = vpop.f32.mrb[0].mxu0
      %v1510 = vadd.f32 0.0, %v1509
      %v1511 = vpop.f32.mrb[0].mxu0
      %v1512 = vadd.f32 0.0, %v1511
      %v1513 = vpop.f32.mrb[0].mxu0
      %v1514 = vadd.f32 0.0, %v1513
      %1515 = vmatprep.mubr.bf16.mxu0 0
      %1516 = vmatmul.mubr.bf16.gmra.mrb[0].mxu0 %v1453
      %v1517 = vpop.f32.mrb[0].mxu0
      %v1518 = vadd.f32 0.0, %v1517
      %v1519 = vpop.f32.mrb[0].mxu0
      %v1520 = vadd.f32 0.0, %v1519
      %v1521 = vpop.f32.mrb[0].mxu0
      %v1522 = vadd.f32 0.0, %v1521
      %v1523 = vpop.f32.mrb[0].mxu0
      %v1524 = vadd.f32 0.0, %v1523
      %1525 = vmatprep.mubr.bf16.mxu0 0
      %1526 = vmatmul.mubr.bf16.gmra.mrb[0].mxu0 %v1456
      %v1527 = vpop.f32.mrb[0].mxu0
      %v1528 = vadd.f32 0.0, %v1527
      %v1529 = vpop.f32.mrb[0].mxu0
      %v1530 = vadd.f32 0.0, %v1529
      %v1531 = vpop.f32.mrb[0].mxu0
      %v1532 = vadd.f32 0.0, %v1531
      %v1533 = vpop.f32.mrb[0].mxu0
      %v1534 = vadd.f32 0.0, %v1533
      %1535 = vmatprep.mubr.bf16.mxu0 0
      %1536 = vmatmul.mubr.bf16.gmra.mrb[0].mxu0 %v1459
      %v1537 = vpop.f32.mrb[0].mxu0
      %v1538 = vadd.f32 0.0, %v1537
      %v1539 = vpop.f32.mrb[0].mxu0
      %v1540 = vadd.f32 0.0, %v1539
      %v1541 = vpop.f32.mrb[0].mxu0
      %v1542 = vadd.f32 0.0, %v1541
      %v1543 = vpop.f32.mrb[0].mxu0
      %v1544 = vadd.f32 0.0, %v1543
      %1545 = vmatprep.mubr.bf16.mxu0 0
      %1546 = vmatmul.mubr.bf16.gmra.mrb[0].mxu0 %v1462
      %v1547 = vpop.f32.mrb[0].mxu0
      %v1548 = vadd.f32 0.0, %v1547
      %v1549 = vpop.f32.mrb[0].mxu0
      %v1550 = vadd.f32 0.0, %v1549
      %v1551 = vpop.f32.mrb[0].mxu0
      %v1552 = vadd.f32 0.0, %v1551
      %v1553 = vpop.f32.mrb[0].mxu0
      %v1554 = vadd.f32 0.0, %v1553
      %1555 = vmatprep.mubr.bf16.mxu0 0
      %1556 = vmatmul.mubr.bf16.gmra.mrb[0].mxu0 %v1465
      %v1557 = vpop.f32.mrb[0].mxu0
      %v1558 = vadd.f32 0.0, %v1557
      %v1559 = vpop.f32.mrb[0].mxu0
      %v1560 = vadd.f32 0.0, %v1559
      %v1561 = vpop.f32.mrb[0].mxu0
      %v1562 = vadd.f32 0.0, %v1561
      %v1563 = vpop.f32.mrb[0].mxu0
      %v1564 = vadd.f32 0.0, %v1563
      %1565 = vmatprep.mubr.bf16.mxu0 0
      %1566 = vmatmul.mubr.bf16.gmra.mrb[0].mxu0 %v1468
      %v1567 = vpop.f32.mrb[0].mxu0
      %v1568 = vadd.f32 0.0, %v1567
      %v1569 = vpop.f32.mrb[0].mxu0
      %v1570 = vadd.f32 0.0, %v1569
      %v1571 = vpop.f32.mrb[0].mxu0
      %v1572 = vadd.f32 0.0, %v1571
      %v1573 = vpop.f32.mrb[0].mxu0
      %v1574 = vadd.f32 0.0, %v1573
      %1575 = vmatprep.mubr.bf16.mxu0 0
      %1576 = vmatmul.mubr.bf16.gmra.mrb[0].mxu0 %v1471
      %v1577 = vpop.f32.mrb[0].mxu0
      %v1578 = vadd.f32 0.0, %v1577
      %v1579 = vpop.f32.mrb[0].mxu0
      %v1580 = vadd.f32 0.0, %v1579
      %v1581 = vpop.f32.mrb[0].mxu0
      %v1582 = vadd.f32 0.0, %v1581
      %v1583 = vpop.f32.mrb[0].mxu0
      %v1584 = vadd.f32 0.0, %v1583
      %1585 = vdwg.mxu0
      %v1586 = vmax.f32 %v1508, %v1510
      %1587 = vmax.xlane.f32.xlu0 %v1586
      %v1588 = vpop.xlane.xlu0 %1587
      %v1589 = vmax.f32 %v1512, %v1514
      %1590 = vmax.xlane.f32.xlu0 %v1589
      %v1591 = vpop.xlane.xlu0 %1590
      %v1592 = vmax.f32 %v1518, %v1520
      %1593 = vmax.xlane.f32.xlu0 %v1592
      %v1594 = vpop.xlane.xlu0 %1593
      %v1595 = vmax.f32 %v1522, %v1524
      %1596 = vmax.xlane.f32.xlu0 %v1595
      %v1597 = vpop.xlane.xlu0 %1596
      %v1598 = vmax.f32 %v1528, %v1530
      %1599 = vmax.xlane.f32.xlu0 %v1598
      %v1600 = vpop.xlane.xlu0 %1599
      %v1601 = vmax.f32 %v1532, %v1534
      %1602 = vmax.xlane.f32.xlu0 %v1601
      %v1603 = vpop.xlane.xlu0 %1602
      %v1604 = vmax.f32 %v1538, %v1540
      %1605 = vmax.xlane.f32.xlu0 %v1604
      %v1606 = vpop.xlane.xlu0 %1605
      %v1607 = vmax.f32 %v1542, %v1544
      %1608 = vmax.xlane.f32.xlu0 %v1607
      %v1609 = vpop.xlane.xlu0 %1608
      %v1610 = vmax.f32 %v1548, %v1550
      %1611 = vmax.xlane.f32.xlu0 %v1610
      %v1612 = vpop.xlane.xlu0 %1611
      %v1613 = vmax.f32 %v1552, %v1554
      %1614 = vmax.xlane.f32.xlu0 %v1613
      %v1615 = vpop.xlane.xlu0 %1614
      %v1616 = vmax.f32 %v1558, %v1560
      %1617 = vmax.xlane.f32.xlu0 %v1616
      %v1618 = vpop.xlane.xlu0 %1617
      %v1619 = vmax.f32 %v1562, %v1564
      %1620 = vmax.xlane.f32.xlu0 %v1619
      %v1621 = vpop.xlane.xlu0 %1620
      %v1622 = vmax.f32 %v1568, %v1570
      %1623 = vmax.xlane.f32.xlu0 %v1622
      %v1624 = vpop.xlane.xlu0 %1623
      %v1625 = vmax.f32 %v1572, %v1574
      %1626 = vmax.xlane.f32.xlu0 %v1625
      %v1627 = vpop.xlane.xlu0 %1626
      %v1628 = vmax.f32 %v1578, %v1580
      %1629 = vmax.xlane.f32.xlu0 %v1628
      %v1630 = vpop.xlane.xlu0 %1629
      %v1631 = vmax.f32 %v1582, %v1584
      %1632 = vmax.xlane.f32.xlu0 %v1631
      %v1633 = vpop.xlane.xlu0 %1632
      %v1634 = vsub.f32 %v1508, %v1588
      %v1635 = vsub.f32 %v1510, %v1588
      %v1636 = vsub.f32 %v1512, %v1591
      %v1637 = vsub.f32 %v1514, %v1591
      %v1638 = vsub.f32 %v1518, %v1594
      %v1639 = vsub.f32 %v1520, %v1594
      %v1640 = vsub.f32 %v1522, %v1597
      %v1641 = vsub.f32 %v1524, %v1597
      %v1642 = vsub.f32 %v1528, %v1600
      %v1643 = vsub.f32 %v1530, %v1600
      %v1644 = vsub.f32 %v1532, %v1603
      %v1645 = vsub.f32 %v1534, %v1603
      %v1646 = vsub.f32 %v1538, %v1606
      %v1647 = vsub.f32 %v1540, %v1606
      %v1648 = vsub.f32 %v1542, %v1609
      %v1649 = vsub.f32 %v1544, %v1609
      %v1650 = vsub.f32 %v1548, %v1612
      %v1651 = vsub.f32 %v1550, %v1612
      %v1652 = vsub.f32 %v1552, %v1615
      %v1653 = vsub.f32 %v1554, %v1615
      %v1654 = vsub.f32 %v1558, %v1618
      %v1655 = vsub.f32 %v1560, %v1618
      %v1656 = vsub.f32 %v1562, %v1621
      %v1657 = vsub.f32 %v1564, %v1621
      %v1658 = vsub.f32 %v1568, %v1624
      %v1659 = vsub.f32 %v1570, %v1624
      %v1660 = vsub.f32 %v1572, %v1627
      %v1661 = vsub.f32 %v1574, %v1627
      %v1662 = vsub.f32 %v1578, %v1630
      %v1663 = vsub.f32 %v1580, %v1630
      %v1664 = vsub.f32 %v1582, %v1633
      %v1665 = vsub.f32 %v1584, %v1633
      %v1666 = vmul.f32 %v1634, 1.442695
      %v1667 = vpow.pop %v1666
      %v1668 = vmul.f32 %v1635, 1.442695
      %v1669 = vpow.pop %v1668
      %v1670 = vmul.f32 %v1636, 1.442695
      %v1671 = vpow.pop %v1670
      %v1672 = vmul.f32 %v1637, 1.442695
      %v1673 = vpow.pop %v1672
      %v1674 = vmul.f32 %v1638, 1.442695
      %v1675 = vpow.pop %v1674
      %v1676 = vmul.f32 %v1639, 1.442695
      %v1677 = vpow.pop %v1676
      %v1678 = vmul.f32 %v1640, 1.442695
      %v1679 = vpow.pop %v1678
      %v1680 = vmul.f32 %v1641, 1.442695
      %v1681 = vpow.pop %v1680
      %v1682 = vmul.f32 %v1642, 1.442695
      %v1683 = vpow.pop %v1682
      %v1684 = vmul.f32 %v1643, 1.442695
      %v1685 = vpow.pop %v1684
      %v1686 = vmul.f32 %v1644, 1.442695
      %v1687 = vpow.pop %v1686
      %v1688 = vmul.f32 %v1645, 1.442695
      %v1689 = vpow.pop %v1688
      %v1690 = vmul.f32 %v1646, 1.442695
      %v1691 = vpow.pop %v1690
      %v1692 = vmul.f32 %v1647, 1.442695
      %v1693 = vpow.pop %v1692
      %v1694 = vmul.f32 %v1648, 1.442695
      %v1695 = vpow.pop %v1694
      %v1696 = vmul.f32 %v1649, 1.442695
      %v1697 = vpow.pop %v1696
      %v1698 = vmul.f32 %v1650, 1.442695
      %v1699 = vpow.pop %v1698
      %v1700 = vmul.f32 %v1651, 1.442695
      %v1701 = vpow.pop %v1700
      %v1702 = vmul.f32 %v1652, 1.442695
      %v1703 = vpow.pop %v1702
      %v1704 = vmul.f32 %v1653, 1.442695
      %v1705 = vpow.pop %v1704
      %v1706 = vmul.f32 %v1654, 1.442695
      %v1707 = vpow.pop %v1706
      %v1708 = vmul.f32 %v1655, 1.442695
      %v1709 = vpow.pop %v1708
      %v1710 = vmul.f32 %v1656, 1.442695
      %v1711 = vpow.pop %v1710
      %v1712 = vmul.f32 %v1657, 1.442695
      %v1713 = vpow.pop %v1712
      %v1714 = vmul.f32 %v1658, 1.442695
      %v1715 = vpow.pop %v1714
      %v1716 = vmul.f32 %v1659, 1.442695
      %v1717 = vpow.pop %v1716
      %v1718 = vmul.f32 %v1660, 1.442695
      %v1719 = vpow.pop %v1718
      %v1720 = vmul.f32 %v1661, 1.442695
      %v1721 = vpow.pop %v1720
      %v1722 = vmul.f32 %v1662, 1.442695
      %v1723 = vpow.pop %v1722
      %v1724 = vmul.f32 %v1663, 1.442695
      %v1725 = vpow.pop %v1724
      %v1726 = vmul.f32 %v1664, 1.442695
      %v1727 = vpow.pop %v1726
      %v1728 = vmul.f32 %v1665, 1.442695
      %v1729 = vpow.pop %v1728
      %v1730 = vadd.f32 %v1667, %v1669
      %1731 = vadd.xlane.f32.xlu0 %v1730
      %v1732 = vpop.xlane.xlu0 %1731
      %v1733 = vadd.f32 %v1671, %v1673
      %1734 = vadd.xlane.f32.xlu0 %v1733
      %v1735 = vpop.xlane.xlu0 %1734
      %v1736 = vadd.f32 %v1675, %v1677
      %1737 = vadd.xlane.f32.xlu0 %v1736
      %v1738 = vpop.xlane.xlu0 %1737
      %v1739 = vadd.f32 %v1679, %v1681
      %1740 = vadd.xlane.f32.xlu0 %v1739
      %v1741 = vpop.xlane.xlu0 %1740
      %v1742 = vadd.f32 %v1683, %v1685
      %1743 = vadd.xlane.f32.xlu0 %v1742
      %v1744 = vpop.xlane.xlu0 %1743
      %v1745 = vadd.f32 %v1687, %v1689
      %1746 = vadd.xlane.f32.xlu0 %v1745
      %v1747 = vpop.xlane.xlu0 %1746
      %v1748 = vadd.f32 %v1691, %v1693
      %1749 = vadd.xlane.f32.xlu0 %v1748
      %v1750 = vpop.xlane.xlu0 %1749
      %v1751 = vadd.f32 %v1695, %v1697
      %1752 = vadd.xlane.f32.xlu0 %v1751
      %v1753 = vpop.xlane.xlu0 %1752
      %v1754 = vadd.f32 %v1699, %v1701
      %1755 = vadd.xlane.f32.xlu0 %v1754
      %v1756 = vpop.xlane.xlu0 %1755
      %v1757 = vadd.f32 %v1703, %v1705
      %1758 = vadd.xlane.f32.xlu0 %v1757
      %v1759 = vpop.xlane.xlu0 %1758
      %v1760 = vadd.f32 %v1707, %v1709
      %1761 = vadd.xlane.f32.xlu0 %v1760
      %v1762 = vpop.xlane.xlu0 %1761
      %v1763 = vadd.f32 %v1711, %v1713
      %1764 = vadd.xlane.f32.xlu0 %v1763
      %v1765 = vpop.xlane.xlu0 %1764
      %v1766 = vadd.f32 %v1715, %v1717
      %1767 = vadd.xlane.f32.xlu0 %v1766
      %v1768 = vpop.xlane.xlu0 %1767
      %v1769 = vadd.f32 %v1719, %v1721
      %1770 = vadd.xlane.f32.xlu0 %v1769
      %v1771 = vpop.xlane.xlu0 %1770
      %v1772 = vadd.f32 %v1723, %v1725
      %1773 = vadd.xlane.f32.xlu0 %v1772
      %v1774 = vpop.xlane.xlu0 %1773
      %v1775 = vadd.f32 %v1727, %v1729
      %1776 = vadd.xlane.f32.xlu0 %v1775
      %v1777 = vpop.xlane.xlu0 %1776
      %v1778 = vrcp.pop %v1732
      %v1779 = vrcp.pop %v1735
      %v1780 = vrcp.pop %v1738
      %v1781 = vrcp.pop %v1741
      %v1782 = vrcp.pop %v1744
      %v1783 = vrcp.pop %v1747
      %v1784 = vrcp.pop %v1750
      %v1785 = vrcp.pop %v1753
      %v1786 = vrcp.pop %v1756
      %v1787 = vrcp.pop %v1759
      %v1788 = vrcp.pop %v1762
      %v1789 = vrcp.pop %v1765
      %v1790 = vrcp.pop %v1768
      %v1791 = vrcp.pop %v1771
      %v1792 = vrcp.pop %v1774
      %v1793 = vrcp.pop %v1777
      %v1794 = vmul.f32 %v1667, %v1778
      %v1795 = vmul.f32 %v1669, %v1778
      %v1796 = vmul.f32 %v1671, %v1779
      %v1797 = vmul.f32 %v1673, %v1779
      %v1798 = vmul.f32 %v1675, %v1780
      %v1799 = vmul.f32 %v1677, %v1780
      %v1800 = vmul.f32 %v1679, %v1781
      %v1801 = vmul.f32 %v1681, %v1781
      %v1802 = vmul.f32 %v1683, %v1782
      %v1803 = vmul.f32 %v1685, %v1782
      %v1804 = vmul.f32 %v1687, %v1783
      %v1805 = vmul.f32 %v1689, %v1783
      %v1806 = vmul.f32 %v1691, %v1784
      %v1807 = vmul.f32 %v1693, %v1784
      %v1808 = vmul.f32 %v1695, %v1785
      %v1809 = vmul.f32 %v1697, %v1785
      %v1810 = vmul.f32 %v1699, %v1786
      %v1811 = vmul.f32 %v1701, %v1786
      %v1812 = vmul.f32 %v1703, %v1787
      %v1813 = vmul.f32 %v1705, %v1787
      %v1814 = vmul.f32 %v1707, %v1788
      %v1815 = vmul.f32 %v1709, %v1788
      %v1816 = vmul.f32 %v1711, %v1789
      %v1817 = vmul.f32 %v1713, %v1789
      %v1818 = vmul.f32 %v1715, %v1790
      %v1819 = vmul.f32 %v1717, %v1790
      %v1820 = vmul.f32 %v1719, %v1791
      %v1821 = vmul.f32 %v1721, %v1791
      %v1822 = vmul.f32 %v1723, %v1792
      %v1823 = vmul.f32 %v1725, %v1792
      %v1824 = vmul.f32 %v1727, %v1793
      %v1825 = vmul.f32 %v1729, %v1793
      %s1826 = scalar_lea.vmem [#allocation4], 8
      %v1827 = vld [vmem:[%s1826] sm:$0xff]
      %v1828 = vld [vmem:[%s1826 + $0x10] sm:$0xff]
      %v1829 = vld [vmem:[%s1826 + $0x20] sm:$0xff]
      %v1830 = vld [vmem:[%s1826 + $0x30] sm:$0xff]
      %v1831 = vld [vmem:[%s1826 + $0x40] sm:$0xff]
      %v1832 = vld [vmem:[%s1826 + $0x50] sm:$0xff]
      %v1833 = vld [vmem:[%s1826 + $0x60] sm:$0xff]
      %v1834 = vld [vmem:[%s1826 + $0x70] sm:$0xff]
      %v1835 = vld [vmem:[#allocation5] sm:$0xff]
      %v1836 = vld [vmem:[#allocation5 + $0x8] sm:$0xff]
      %v1837 = vld [vmem:[#allocation5 + $0x10] sm:$0xff]
      %v1838 = vld [vmem:[#allocation5 + $0x18] sm:$0xff]
      %v1839 = vld [vmem:[#allocation5 + $0x20] sm:$0xff]
      %v1840 = vld [vmem:[#allocation5 + $0x28] sm:$0xff]
      %v1841 = vld [vmem:[#allocation5 + $0x30] sm:$0xff]
      %v1842 = vld [vmem:[#allocation5 + $0x38] sm:$0xff]
      %v1843 = vld [vmem:[#allocation5 + $0x40] sm:$0xff]
      %v1844 = vld [vmem:[#allocation5 + $0x48] sm:$0xff]
      %v1845 = vld [vmem:[#allocation5 + $0x50] sm:$0xff]
      %v1846 = vld [vmem:[#allocation5 + $0x58] sm:$0xff]
      %v1847 = vld [vmem:[#allocation5 + $0x60] sm:$0xff]
      %v1848 = vld [vmem:[#allocation5 + $0x68] sm:$0xff]
      %v1849 = vld [vmem:[#allocation5 + $0x70] sm:$0xff]
      %v1850 = vld [vmem:[#allocation5 + $0x78] sm:$0xff]
      %v1851 = vld [vmem:[#allocation5 + $0x80] sm:$0xff]
      %v1852 = vld [vmem:[#allocation5 + $0x88] sm:$0xff]
      %v1853 = vld [vmem:[#allocation5 + $0x90] sm:$0xff]
      %v1854 = vld [vmem:[#allocation5 + $0x98] sm:$0xff]
      %v1855 = vld [vmem:[#allocation5 + $0xa0] sm:$0xff]
      %v1856 = vld [vmem:[#allocation5 + $0xa8] sm:$0xff]
      %v1857 = vld [vmem:[#allocation5 + $0xb0] sm:$0xff]
      %v1858 = vld [vmem:[#allocation5 + $0xb8] sm:$0xff]
      %v1859 = vld [vmem:[#allocation5 + $0xc0] sm:$0xff]
      %v1860 = vld [vmem:[#allocation5 + $0xc8] sm:$0xff]
      %v1861 = vld [vmem:[#allocation5 + $0xd0] sm:$0xff]
      %v1862 = vld [vmem:[#allocation5 + $0xd8] sm:$0xff]
      %v1863 = vld [vmem:[#allocation5 + $0xe0] sm:$0xff]
      %v1864 = vld [vmem:[#allocation5 + $0xe8] sm:$0xff]
      %v1865 = vld [vmem:[#allocation5 + $0xf0] sm:$0xff]
      %v1866 = vld [vmem:[#allocation5 + $0xf8] sm:$0xff]
      %v1867 = vpack.c.bf16 %v1796, %v1794
      %v1868 = vpack.c.bf16 %v1797, %v1795
      %v1869 = vpack.c.bf16 %v1800, %v1798
      %v1870 = vpack.c.bf16 %v1801, %v1799
      %v1871 = vpack.c.bf16 %v1804, %v1802
      %v1872 = vpack.c.bf16 %v1805, %v1803
      %v1873 = vpack.c.bf16 %v1808, %v1806
      %v1874 = vpack.c.bf16 %v1809, %v1807
      %v1875 = vpack.c.bf16 %v1812, %v1810
      %v1876 = vpack.c.bf16 %v1813, %v1811
      %v1877 = vpack.c.bf16 %v1816, %v1814
      %v1878 = vpack.c.bf16 %v1817, %v1815
      %v1879 = vpack.c.bf16 %v1820, %v1818
      %v1880 = vpack.c.bf16 %v1821, %v1819
      %v1881 = vpack.c.bf16 %v1824, %v1822
      %v1882 = vpack.c.bf16 %v1825, %v1823
      %1883 = vmatprep.subr.bf16.mxu0 %v1868
      %1884 = vmatpush1.bf16.msra.mxu0 %v1867
      %1885 = vmatprep.subr.bf16.mxu0 %v1870
      %1886 = vmatpush1.bf16.msra.mxu0 %v1869
      %1887 = vmatprep.subr.bf16.mxu0 %v1872
      %1888 = vmatpush1.bf16.msra.mxu0 %v1871
      %1889 = vmatprep.subr.bf16.mxu0 %v1874
      %1890 = vmatpush1.bf16.msra.mxu0 %v1873
      %1891 = vmatprep.subr.bf16.mxu0 %v1876
      %1892 = vmatpush1.bf16.msra.mxu0 %v1875
      %1893 = vmatprep.subr.bf16.mxu0 %v1878
      %1894 = vmatpush1.bf16.msra.mxu0 %v1877
      %1895 = vmatprep.subr.bf16.mxu0 %v1880
      %1896 = vmatpush1.bf16.msra.mxu0 %v1879
      %1897 = vmatprep.subr.bf16.mxu0 %v1882
      %1898 = vmatpush1.bf16.msra.mxu0 %v1881
      %1899 = vmatprep.subr.bf16.mxu0 0
      %1900 = vmatpush1.bf16.msra.mxu0 0
      %1901 = vmatprep.subr.bf16.mxu0 0
      %1902 = vmatpush1.bf16.msra.mxu0 0
      %1903 = vmatprep.subr.bf16.mxu0 0
      %1904 = vmatpush1.bf16.msra.mxu0 0
      %1905 = vmatprep.subr.bf16.mxu0 0
      %1906 = vmatpush1.bf16.msra.mxu0 0
      %1907 = vmatprep.subr.bf16.mxu0 0
      %1908 = vmatpush1.bf16.msra.mxu0 0
      %1909 = vmatprep.subr.bf16.mxu0 0
      %1910 = vmatpush1.bf16.msra.mxu0 0
      %1911 = vmatprep.subr.bf16.mxu0 0
      %1912 = vmatpush1.bf16.msra.mxu0 0
      %1913 = vmatprep.subr.bf16.mxu0 0
      %1914 = vmatpush1.bf16.msra.mxu0 0
      %1915 = vmatprep.mubr.bf16.mxu0 0
      %1916 = vmatmul.mubr.bf16.gmra.mrb[0].mxu0 %v1827
      %v1917 = vpop.f32.mrb[0].mxu0
      %v1918 = vadd.f32 0.0, %v1917
      %v1919 = vpop.f32.mrb[0].mxu0
      %v1920 = vadd.f32 0.0, %v1919
      %v1921 = vpop.f32.mrb[0].mxu0
      %v1922 = vadd.f32 0.0, %v1921
      %v1923 = vpop.f32.mrb[0].mxu0
      %v1924 = vadd.f32 0.0, %v1923
      %1925 = vmatprep.mubr.bf16.mxu0 0
      %1926 = vmatmul.mubr.bf16.gmra.mrb[0].mxu0 %v1828
      %v1927 = vpop.f32.mrb[0].mxu0
      %v1928 = vadd.f32 0.0, %v1927
      %v1929 = vpop.f32.mrb[0].mxu0
      %v1930 = vadd.f32 0.0, %v1929
      %v1931 = vpop.f32.mrb[0].mxu0
      %v1932 = vadd.f32 0.0, %v1931
      %v1933 = vpop.f32.mrb[0].mxu0
      %v1934 = vadd.f32 0.0, %v1933
      %1935 = vmatprep.mubr.bf16.mxu0 0
      %1936 = vmatmul.mubr.bf16.gmra.mrb[0].mxu0 %v1829
      %v1937 = vpop.f32.mrb[0].mxu0
      %v1938 = vadd.f32 0.0, %v1937
      %v1939 = vpop.f32.mrb[0].mxu0
      %v1940 = vadd.f32 0.0, %v1939
      %v1941 = vpop.f32.mrb[0].mxu0
      %v1942 = vadd.f32 0.0, %v1941
      %v1943 = vpop.f32.mrb[0].mxu0
      %v1944 = vadd.f32 0.0, %v1943
      %1945 = vmatprep.mubr.bf16.mxu0 0
      %1946 = vmatmul.mubr.bf16.gmra.mrb[0].mxu0 %v1830
      %v1947 = vpop.f32.mrb[0].mxu0
      %v1948 = vadd.f32 0.0, %v1947
      %v1949 = vpop.f32.mrb[0].mxu0
      %v1950 = vadd.f32 0.0, %v1949
      %v1951 = vpop.f32.mrb[0].mxu0
      %v1952 = vadd.f32 0.0, %v1951
      %v1953 = vpop.f32.mrb[0].mxu0
      %v1954 = vadd.f32 0.0, %v1953
      %1955 = vmatprep.mubr.bf16.mxu0 0
      %1956 = vmatmul.mubr.bf16.gmra.mrb[0].mxu0 %v1831
      %v1957 = vpop.f32.mrb[0].mxu0
      %v1958 = vadd.f32 0.0, %v1957
      %v1959 = vpop.f32.mrb[0].mxu0
      %v1960 = vadd.f32 0.0, %v1959
      %v1961 = vpop.f32.mrb[0].mxu0
      %v1962 = vadd.f32 0.0, %v1961
      %v1963 = vpop.f32.mrb[0].mxu0
      %v1964 = vadd.f32 0.0, %v1963
      %1965 = vmatprep.mubr.bf16.mxu0 0
      %1966 = vmatmul.mubr.bf16.gmra.mrb[0].mxu0 %v1832
      %v1967 = vpop.f32.mrb[0].mxu0
      %v1968 = vadd.f32 0.0, %v1967
      %v1969 = vpop.f32.mrb[0].mxu0
      %v1970 = vadd.f32 0.0, %v1969
      %v1971 = vpop.f32.mrb[0].mxu0
      %v1972 = vadd.f32 0.0, %v1971
      %v1973 = vpop.f32.mrb[0].mxu0
      %v1974 = vadd.f32 0.0, %v1973
      %1975 = vmatprep.mubr.bf16.mxu0 0
      %1976 = vmatmul.mubr.bf16.gmra.mrb[0].mxu0 %v1833
      %v1977 = vpop.f32.mrb[0].mxu0
      %v1978 = vadd.f32 0.0, %v1977
      %v1979 = vpop.f32.mrb[0].mxu0
      %v1980 = vadd.f32 0.0, %v1979
      %v1981 = vpop.f32.mrb[0].mxu0
      %v1982 = vadd.f32 0.0, %v1981
      %v1983 = vpop.f32.mrb[0].mxu0
      %v1984 = vadd.f32 0.0, %v1983
      %1985 = vmatprep.mubr.bf16.mxu0 0
      %1986 = vmatmul.mubr.bf16.gmra.mrb[0].mxu0 %v1834
      %v1987 = vpop.f32.mrb[0].mxu0
      %v1988 = vadd.f32 0.0, %v1987
      %v1989 = vpop.f32.mrb[0].mxu0
      %v1990 = vadd.f32 0.0, %v1989
      %v1991 = vpop.f32.mrb[0].mxu0
      %v1992 = vadd.f32 0.0, %v1991
      %v1993 = vpop.f32.mrb[0].mxu0
      %v1994 = vadd.f32 0.0, %v1993
      %1995 = vdwg.mxu0
      %v1996 = vadd.f32 %v1835, %v1918
      %v1997 = vadd.f32 %v1836, %v1920
      %v1998 = vadd.f32 %v1837, %v1922
      %v1999 = vadd.f32 %v1838, %v1924
      %v2000 = vadd.f32 %v1839, %v1928
      %v2001 = vadd.f32 %v1840, %v1930
      %v2002 = vadd.f32 %v1841, %v1932
      %v2003 = vadd.f32 %v1842, %v1934
      %v2004 = vadd.f32 %v1843, %v1938
      %v2005 = vadd.f32 %v1844, %v1940
      %v2006 = vadd.f32 %v1845, %v1942
      %v2007 = vadd.f32 %v1846, %v1944
      %v2008 = vadd.f32 %v1847, %v1948
      %v2009 = vadd.f32 %v1848, %v1950
      %v2010 = vadd.f32 %v1849, %v1952
      %v2011 = vadd.f32 %v1850, %v1954
      %v2012 = vadd.f32 %v1851, %v1958
      %v2013 = vadd.f32 %v1852, %v1960
      %v2014 = vadd.f32 %v1853, %v1962
      %v2015 = vadd.f32 %v1854, %v1964
      %v2016 = vadd.f32 %v1855, %v1968
      %v2017 = vadd.f32 %v1856, %v1970
      %v2018 = vadd.f32 %v1857, %v1972
      %v2019 = vadd.f32 %v1858, %v1974
      %v2020 = vadd.f32 %v1859, %v1978
      %v2021 = vadd.f32 %v1860, %v1980
      %v2022 = vadd.f32 %v1861, %v1982
      %v2023 = vadd.f32 %v1862, %v1984
      %v2024 = vadd.f32 %v1863, %v1988
      %v2025 = vadd.f32 %v1864, %v1990
      %v2026 = vadd.f32 %v1865, %v1992
      %v2027 = vadd.f32 %v1866, %v1994
      %2028 = vst [vmem:[#allocation5] sm:$0xff] %v1996
      %2029 = vst [vmem:[#allocation5 + $0x8] sm:$0xff] %v1997
      %2030 = vst [vmem:[#allocation5 + $0x10] sm:$0xff] %v1998
      %2031 = vst [vmem:[#allocation5 + $0x18] sm:$0xff] %v1999
      %2032 = vst [vmem:[#allocation5 + $0x20] sm:$0xff] %v2000
      %2033 = vst [vmem:[#allocation5 + $0x28] sm:$0xff] %v2001
      %2034 = vst [vmem:[#allocation5 + $0x30] sm:$0xff] %v2002
      %2035 = vst [vmem:[#allocation5 + $0x38] sm:$0xff] %v2003
      %2036 = vst [vmem:[#allocation5 + $0x40] sm:$0xff] %v2004
      %2037 = vst [vmem:[#allocation5 + $0x48] sm:$0xff] %v2005
      %2038 = vst [vmem:[#allocation5 + $0x50] sm:$0xff] %v2006
      %2039 = vst [vmem:[#allocation5 + $0x58] sm:$0xff] %v2007
      %2040 = vst [vmem:[#allocation5 + $0x60] sm:$0xff] %v2008
      %2041 = vst [vmem:[#allocation5 + $0x68] sm:$0xff] %v2009
      %2042 = vst [vmem:[#allocation5 + $0x70] sm:$0xff] %v2010
      %2043 = vst [vmem:[#allocation5 + $0x78] sm:$0xff] %v2011
      %2044 = vst [vmem:[#allocation5 + $0x80] sm:$0xff] %v2012
      %2045 = vst [vmem:[#allocation5 + $0x88] sm:$0xff] %v2013
      %2046 = vst [vmem:[#allocation5 + $0x90] sm:$0xff] %v2014
      %2047 = vst [vmem:[#allocation5 + $0x98] sm:$0xff] %v2015
      %2048 = vst [vmem:[#allocation5 + $0xa0] sm:$0xff] %v2016
      %2049 = vst [vmem:[#allocation5 + $0xa8] sm:$0xff] %v2017
      %2050 = vst [vmem:[#allocation5 + $0xb0] sm:$0xff] %v2018
      %2051 = vst [vmem:[#allocation5 + $0xb8] sm:$0xff] %v2019
      %2052 = vst [vmem:[#allocation5 + $0xc0] sm:$0xff] %v2020
      %2053 = vst [vmem:[#allocation5 + $0xc8] sm:$0xff] %v2021
      %2054 = vst [vmem:[#allocation5 + $0xd0] sm:$0xff] %v2022
      %2055 = vst [vmem:[#allocation5 + $0xd8] sm:$0xff] %v2023
      %2056 = vst [vmem:[#allocation5 + $0xe0] sm:$0xff] %v2024
      %2057 = vst [vmem:[#allocation5 + $0xe8] sm:$0xff] %v2025
      %2058 = vst [vmem:[#allocation5 + $0xf0] sm:$0xff] %v2026
      %2059 = vst [vmem:[#allocation5 + $0xf8] sm:$0xff] %v2027
      %v2060 = vld [vmem:[#allocation5] sm:$0xff]
      %v2061 = vld [vmem:[#allocation5 + $0x8] sm:$0xff]
      %v2062 = vld [vmem:[#allocation5 + $0x10] sm:$0xff]
      %v2063 = vld [vmem:[#allocation5 + $0x18] sm:$0xff]
      %v2064 = vld [vmem:[#allocation5 + $0x20] sm:$0xff]
      %v2065 = vld [vmem:[#allocation5 + $0x28] sm:$0xff]
      %v2066 = vld [vmem:[#allocation5 + $0x30] sm:$0xff]
      %v2067 = vld [vmem:[#allocation5 + $0x38] sm:$0xff]
      %v2068 = vld [vmem:[#allocation5 + $0x40] sm:$0xff]
      %v2069 = vld [vmem:[#allocation5 + $0x48] sm:$0xff]
      %v2070 = vld [vmem:[#allocation5 + $0x50] sm:$0xff]
      %v2071 = vld [vmem:[#allocation5 + $0x58] sm:$0xff]
      %v2072 = vld [vmem:[#allocation5 + $0x60] sm:$0xff]
      %v2073 = vld [vmem:[#allocation5 + $0x68] sm:$0xff]
      %v2074 = vld [vmem:[#allocation5 + $0x70] sm:$0xff]
      %v2075 = vld [vmem:[#allocation5 + $0x78] sm:$0xff]
      %v2076 = vld [vmem:[#allocation5 + $0x80] sm:$0xff]
      %v2077 = vld [vmem:[#allocation5 + $0x88] sm:$0xff]
      %v2078 = vld [vmem:[#allocation5 + $0x90] sm:$0xff]
      %v2079 = vld [vmem:[#allocation5 + $0x98] sm:$0xff]
      %v2080 = vld [vmem:[#allocation5 + $0xa0] sm:$0xff]
      %v2081 = vld [vmem:[#allocation5 + $0xa8] sm:$0xff]
      %v2082 = vld [vmem:[#allocation5 + $0xb0] sm:$0xff]
      %v2083 = vld [vmem:[#allocation5 + $0xb8] sm:$0xff]
      %v2084 = vld [vmem:[#allocation5 + $0xc0] sm:$0xff]
      %v2085 = vld [vmem:[#allocation5 + $0xc8] sm:$0xff]
      %v2086 = vld [vmem:[#allocation5 + $0xd0] sm:$0xff]
      %v2087 = vld [vmem:[#allocation5 + $0xd8] sm:$0xff]
      %v2088 = vld [vmem:[#allocation5 + $0xe0] sm:$0xff]
      %v2089 = vld [vmem:[#allocation5 + $0xe8] sm:$0xff]
      %v2090 = vld [vmem:[#allocation5 + $0xf0] sm:$0xff]
      %v2091 = vld [vmem:[#allocation5 + $0xf8] sm:$0xff]
      %v2092 = vld [vmem:[%s273] sm:$0xff]
      %v2093 = vld [vmem:[%s273 + $0x8] sm:$0xff]
      %v2094 = vld [vmem:[%s273 + $0x10] sm:$0xff]
      %v2095 = vld [vmem:[%s273 + $0x18] sm:$0xff]
      %v2096 = vld [vmem:[%s273 + $0x20] sm:$0xff]
      %v2097 = vld [vmem:[%s273 + $0x28] sm:$0xff]
      %v2098 = vld [vmem:[%s273 + $0x30] sm:$0xff]
      %v2099 = vld [vmem:[%s273 + $0x38] sm:$0xff]
      %v2100 = vld [vmem:[%s273 + $0x40] sm:$0xff]
      %v2101 = vld [vmem:[%s273 + $0x48] sm:$0xff]
      %v2102 = vld [vmem:[%s273 + $0x50] sm:$0xff]
      %v2103 = vld [vmem:[%s273 + $0x58] sm:$0xff]
      %v2104 = vld [vmem:[%s273 + $0x60] sm:$0xff]
      %v2105 = vld [vmem:[%s273 + $0x68] sm:$0xff]
      %v2106 = vld [vmem:[%s273 + $0x70] sm:$0xff]
      %v2107 = vld [vmem:[%s273 + $0x78] sm:$0xff]
      %v2108 = vld [vmem:[%s273 + $0x80] sm:$0xff]
      %v2109 = vld [vmem:[%s273 + $0x88] sm:$0xff]
      %v2110 = vld [vmem:[%s273 + $0x90] sm:$0xff]
      %v2111 = vld [vmem:[%s273 + $0x98] sm:$0xff]
      %v2112 = vld [vmem:[%s273 + $0xa0] sm:$0xff]
      %v2113 = vld [vmem:[%s273 + $0xa8] sm:$0xff]
      %v2114 = vld [vmem:[%s273 + $0xb0] sm:$0xff]
      %v2115 = vld [vmem:[%s273 + $0xb8] sm:$0xff]
      %v2116 = vld [vmem:[%s273 + $0xc0] sm:$0xff]
      %v2117 = vld [vmem:[%s273 + $0xc8] sm:$0xff]
      %v2118 = vld [vmem:[%s273 + $0xd0] sm:$0xff]
      %v2119 = vld [vmem:[%s273 + $0xd8] sm:$0xff]
      %v2120 = vld [vmem:[%s273 + $0xe0] sm:$0xff]
      %v2121 = vld [vmem:[%s273 + $0xe8] sm:$0xff]
      %v2122 = vld [vmem:[%s273 + $0xf0] sm:$0xff]
      %v2123 = vld [vmem:[%s273 + $0xf8] sm:$0xff]
      %v2124 = vadd.f32 %v2060, %v2092
      %v2125 = vadd.f32 %v2061, %v2093
      %v2126 = vadd.f32 %v2062, %v2094
      %v2127 = vadd.f32 %v2063, %v2095
      %v2128 = vadd.f32 %v2064, %v2096
      %v2129 = vadd.f32 %v2065, %v2097
      %v2130 = vadd.f32 %v2066, %v2098
      %v2131 = vadd.f32 %v2067, %v2099
      %v2132 = vadd.f32 %v2068, %v2100
      %v2133 = vadd.f32 %v2069, %v2101
      %v2134 = vadd.f32 %v2070, %v2102
      %v2135 = vadd.f32 %v2071, %v2103
      %v2136 = vadd.f32 %v2072, %v2104
      %v2137 = vadd.f32 %v2073, %v2105
      %v2138 = vadd.f32 %v2074, %v2106
      %v2139 = vadd.f32 %v2075, %v2107
      %v2140 = vadd.f32 %v2076, %v2108
      %v2141 = vadd.f32 %v2077, %v2109
      %v2142 = vadd.f32 %v2078, %v2110
      %v2143 = vadd.f32 %v2079, %v2111
      %v2144 = vadd.f32 %v2080, %v2112
      %v2145 = vadd.f32 %v2081, %v2113
      %v2146 = vadd.f32 %v2082, %v2114
      %v2147 = vadd.f32 %v2083, %v2115
      %v2148 = vadd.f32 %v2084, %v2116
      %v2149 = vadd.f32 %v2085, %v2117
      %v2150 = vadd.f32 %v2086, %v2118
      %v2151 = vadd.f32 %v2087, %v2119
      %v2152 = vadd.f32 %v2088, %v2120
      %v2153 = vadd.f32 %v2089, %v2121
      %v2154 = vadd.f32 %v2090, %v2122
      %v2155 = vadd.f32 %v2091, %v2123
      %2156 = vst [vmem:[%s278] sm:$0xff] %v2124
      %2157 = vst [vmem:[%s278 + $0x8] sm:$0xff] %v2125
      %2158 = vst [vmem:[%s278 + $0x10] sm:$0xff] %v2126
      %2159 = vst [vmem:[%s278 + $0x18] sm:$0xff] %v2127
      %2160 = vst [vmem:[%s278 + $0x20] sm:$0xff] %v2128
      %2161 = vst [vmem:[%s278 + $0x28] sm:$0xff] %v2129
      %2162 = vst [vmem:[%s278 + $0x30] sm:$0xff] %v2130
      %2163 = vst [vmem:[%s278 + $0x38] sm:$0xff] %v2131
      %2164 = vst [vmem:[%s278 + $0x40] sm:$0xff] %v2132
      %2165 = vst [vmem:[%s278 + $0x48] sm:$0xff] %v2133
      %2166 = vst [vmem:[%s278 + $0x50] sm:$0xff] %v2134
      %2167 = vst [vmem:[%s278 + $0x58] sm:$0xff] %v2135
      %2168 = vst [vmem:[%s278 + $0x60] sm:$0xff] %v2136
      %2169 = vst [vmem:[%s278 + $0x68] sm:$0xff] %v2137
      %2170 = vst [vmem:[%s278 + $0x70] sm:$0xff] %v2138
      %2171 = vst [vmem:[%s278 + $0x78] sm:$0xff] %v2139
      %2172 = vst [vmem:[%s278 + $0x80] sm:$0xff] %v2140
      %2173 = vst [vmem:[%s278 + $0x88] sm:$0xff] %v2141
      %2174 = vst [vmem:[%s278 + $0x90] sm:$0xff] %v2142
      %2175 = vst [vmem:[%s278 + $0x98] sm:$0xff] %v2143
      %2176 = vst [vmem:[%s278 + $0xa0] sm:$0xff] %v2144
      %2177 = vst [vmem:[%s278 + $0xa8] sm:$0xff] %v2145
      %2178 = vst [vmem:[%s278 + $0xb0] sm:$0xff] %v2146
      %2179 = vst [vmem:[%s278 + $0xb8] sm:$0xff] %v2147
      %2180 = vst [vmem:[%s278 + $0xc0] sm:$0xff] %v2148
      %2181 = vst [vmem:[%s278 + $0xc8] sm:$0xff] %v2149
      %2182 = vst [vmem:[%s278 + $0xd0] sm:$0xff] %v2150
      %2183 = vst [vmem:[%s278 + $0xd8] sm:$0xff] %v2151
      %2184 = vst [vmem:[%s278 + $0xe0] sm:$0xff] %v2152
      %2185 = vst [vmem:[%s278 + $0xe8] sm:$0xff] %v2153
      %2186 = vst [vmem:[%s278 + $0xf0] sm:$0xff] %v2154
      %2187 = vst [vmem:[%s278 + $0xf8] sm:$0xff] %v2155
      %p2188 = scmp.lt.s32.totalorder %s18, 1
      %s2189 = scalar_select %p2188, %s18, 1
      %s2190 = smul.addr %s2189, 32
      %s2191 = smul.addr %s2190, 8
      %s2192 = scalar_lea.vmem %s7, %s2191
      // Predicated region
      $region49: #{_lambda_.1} parent=47 // pred_check
        %p2193 = pneg %p188
      $region50: #{_lambda_.1} parent=47 // pred_check_branch
        %2195 = sbr.rel (%p2193) target = $region52
      $region51: #{_lambda_.1} parent=47 // pred_region
        _
      $region52: #{_lambda_.1} parent=47 // pred_fallthru
        _
    $region48: #{_lambda_.1} parent=5 // pred_fallthru
      _
    %p2196 = scmp.le.s32.totalorder 2, %s13
    // Predicated region
    $region53: #{_lambda_.1} parent=5 // pred_check
      %p2197 = pneg %p2196
    $region54: #{_lambda_.1} parent=5 // pred_check_branch
      %2199 = sbr.rel (%p2197) target = $region56
    $region55: #{_lambda_.1} parent=5 // pred_region
      %s2200 = ssub.s32 %s13, 2
      // Predicated region
      $region57: #{_lambda_.1} parent=55 // pred_check
        %p2201 = pneg %p194
      $region58: #{_lambda_.1} parent=55 // pred_check_branch
        %2203 = sbr.rel (%p2201) target = $region60
      $region59: #{_lambda_.1} parent=55 // pred_region
        %p2204 = scmp.lt.s32.totalorder %s19, 1
        %s2205 = scalar_select %p2204, %s19, 1
        %s2206 = smul.addr %s2205, 32
        %s2207 = smul.addr %s2206, 8
        %s2208 = scalar_lea.vmem %s7, %s2207
      $region60: #{_lambda_.1} parent=55 // pred_fallthru
        _
    $region56: #{_lambda_.1} parent=5 // pred_fallthru
      _
  $region6: #{_lambda_.1} parent=0 // loop_footer
    %s17 = sadd.s32 1, %s13
  $region7: #{_lambda_.1} parent=0 // loop_footer_branch
    %12 = sbr.rel target = $region3
  $region8: #{_lambda_.1} parent=0 // loop_exit
    _

</llo_original>
